<compile_context>
chip_gen: v5e
topology: v5e:2x2
jax: 0.10.0
libtpu: 0.0.40
codegen_flags: <defaults>
</compile_context>

<pallas_src>
import jax
import jax.numpy as jnp
from jax import lax
from jax.experimental import pallas as pl
from jax.experimental.pallas import tpu as pltpu

# ----------------------------- dimensions ---------------------------------
USER_EMB_DIM = 78            # int(sqrt(6040)) + 1
MOVIE_EMB_DIM = 63           # int(sqrt(3952)) + 1
IN_DIM = USER_EMB_DIM + MOVIE_EMB_DIM   # 141 (matches nn.Linear(141, 512))
K_AUG = IN_DIM + 1           # +1 ones column that carries the layer-1 bias
IN_PAD = 256                 # layer-1 K axis padded to a lane multiple
H1 = 512
H2 = 256
OUT_DIM = 1
LEAKY_SLOPE = 0.01           # PyTorch nn.LeakyReLU default
BN_EPS = 1e-5

TB_MAX = 1024                # max batch tile (batch lives on the lane axis in-kernel)


def _round_up(x, m):
    return (x + m - 1) // m * m


def _batch_tiling(B):
    """Pick (tile, padded_batch): tiles as large as possible (<= TB_MAX) while
    guaranteeing a grid of >= 2 tiles so both v7x TensorCores get work."""
    tb = min(TB_MAX, max(128, _round_up((B + 1) // 2, 128)))
    b_pad = max(2 * tb, _round_up(B, tb))
    return tb, b_pad


# ------------------------------ Pallas kernel ------------------------------
def _mlp_kernel(x_ref, w1_ref, w2_ref, b2_ref, w3_ref, b3_ref, out_ref):
    """Batch is the lane (last) axis of every intermediate / the output.

    x_ref  : (TB, IN_PAD) bf16  features + ones column (bias) + zero K padding
    w1_ref : (H1, IN_PAD) bf16  BN1-folded Linear(141,512).T with b1 in the ones column
    w2_ref : (H2, H1)     bf16  BN2-folded Linear(512,256).T
    b2_ref : (H2, 1)      f32   BN2-folded bias
    w3_ref : (H2, 1)      f32   Linear(256,1) weight column
    b3_ref : (1, 1)       f32
    out_ref: (1, TB)      f32   sigmoid(logits), lane-dense
    """
    # Layer 1 (+ folded BN1, bias via the ones column): contract the shared last axis.
    # (H1, K) x (TB, K) -> (H1, TB); bf16 MXU inputs, f32 accumulation.
    h1 = lax.dot_general(
        w1_ref[...], x_ref[...],
        dimension_numbers=(((1,), (1,)), ((), ())),
        preferred_element_type=jnp.float32)
    h1 = jnp.maximum(h1, LEAKY_SLOPE * h1)          # LeakyReLU (slope < 1)

    # Layer 2 (+ folded BN2): (H2, H1) x (H1, TB) -> (H2, TB)
    h2 = jnp.dot(w2_ref[...], h1.astype(jnp.bfloat16),
                 preferred_element_type=jnp.float32) + b2_ref[...]
    h2 = jnp.maximum(h2, LEAKY_SLOPE * h2)

    # Layer 3 (256 -> 1): VPU multiply + sublane reduction (no N=1 MXU matmul),
    # output stays lane-dense.
    logit = jnp.sum(h2 * w3_ref[...], axis=0, keepdims=True) + b3_ref[...]   # (1, TB)

    # Numerically stable sigmoid with a single divide (no inf intermediates).
    z = jnp.exp(-jnp.abs(logit))
    inv = pl.reciprocal(1.0 + z)
    out_ref[...] = jnp.where(logit >= 0, inv, z * inv)


def _mlp_pallas(x, w1_t, w2_t, b2, w3, b3, *, tb):
    b_pad, in_pad = x.shape
    assert in_pad == IN_PAD and b_pad % tb == 0 and b_pad // tb >= 1

    def rep(shape):
        # replicated (non-tiled) parameter block = full array every grid step
        return pl.BlockSpec(shape, lambda i: tuple(0 for _ in shape))

    return pl.pallas_call(
        _mlp_kernel,
        out_shape=jax.ShapeDtypeStruct((1, b_pad), jnp.float32),
        grid_spec=pltpu.PrefetchScalarGridSpec(
            num_scalar_prefetch=0,
            grid=(b_pad // tb,),                 # >= 2 tiles (megacore on v7x)
            in_specs=[
                pl.BlockSpec((tb, IN_PAD), lambda i: (i, 0)),   # features, batch-tiled
                rep((H1, IN_PAD)),
                rep((H2, H1)),
                rep((H2, 1)),
                rep((H2, 1)),
                rep((1, 1)),
            ],
            out_specs=pl.BlockSpec((1, tb), lambda i: (0, i)),  # lane-dense output row
        ),
        compiler_params=pltpu.CompilerParams(
            dimension_semantics=("parallel",)),
    )(x, w1_t, w2_t, b2, w3, b3)


# ------------------------------ parameters ---------------------------------
def init_params(key, num_users=50, num_movies=40):
    ks = jax.random.split(key, 16)
    u = lambda k, shape, s=0.05: jax.random.uniform(k, shape, jnp.float32, -s, s)

    return dict(
        emb_user=u(ks[0], (num_users + 1, USER_EMB_DIM), 0.1),
        emb_movie=u(ks[1], (num_movies + 1, MOVIE_EMB_DIM), 0.1),
        # Linear weights stored as (in, out)  (== PyTorch weight.T)
        w1=u(ks[2], (IN_DIM, H1)), b1=u(ks[3], (H1,)),
        w2=u(ks[4], (H1, H2)),     b2=u(ks[5], (H2,)),
        w3=u(ks[6], (H2, OUT_DIM)), b3=u(ks[7], (OUT_DIM,)),
        # BatchNorm1d params / running stats (eval mode)
        bn1_gamma=1.0 + u(ks[8], (H1,)), bn1_beta=u(ks[9], (H1,)),
        bn1_mean=u(ks[10], (H1,)),        bn1_var=1.0 + u(ks[11], (H1,), 0.02),
        bn2_gamma=1.0 + u(ks[12], (H2,)), bn2_beta=u(ks[13], (H2,)),
        bn2_mean=u(ks[14], (H2,)),        bn2_var=1.0 + u(ks[15], (H2,), 0.02),
    )


def _fold_bn(gamma, beta, mean, var):
    scale = gamma / jnp.sqrt(var + BN_EPS)
    shift = beta - mean * scale
    return scale, shift


def prepare_inference_params(params):
    """One-time weight prep (hoisted out of the per-call forward):
    fold eval-mode BN into the linears, fold b1 into a ones column of w1,
    transpose / pad / cast to the kernel-ready layout."""
    s1, t1 = _fold_bn(params["bn1_gamma"], params["bn1_beta"],
                      params["bn1_mean"], params["bn1_var"])
    s2, t2 = _fold_bn(params["bn2_gamma"], params["bn2_beta"],
                      params["bn2_mean"], params["bn2_var"])
    w1f = params["w1"] * s1[None, :]            # (IN_DIM, H1)
    b1f = params["b1"] * s1 + t1                # (H1,)
    w2f = params["w2"] * s2[None, :]            # (H1, H2)
    b2f = params["b2"] * s2 + t2                # (H2,)

    # Layer-1 weight with the bias as an extra K row (matched by the ones column in x),
    # padded to IN_PAD on the K axis and transposed to (H1, IN_PAD).
    w1_aug = jnp.concatenate([w1f, b1f[None, :]], axis=0)              # (K_AUG, H1)
    w1_t = jnp.pad(w1_aug.T, ((0, 0), (0, IN_PAD - K_AUG)))            # (H1, IN_PAD)

    return dict(
        emb_user=params["emb_user"],
        emb_movie=params["emb_movie"],
        w1_t=w1_t.astype(jnp.bfloat16),                                # (H1, IN_PAD)
        w2_t=w2f.T.astype(jnp.bfloat16),                               # (H2, H1)
        b2=b2f.reshape(H2, 1).astype(jnp.float32),
        w3=params["w3"].reshape(H2, 1).astype(jnp.float32),
        b3=params["b3"].reshape(1, 1).astype(jnp.float32),
    )


# ------------------------------ forward (glue + kernel) --------------------
@jax.jit
def bst_without_forward(prep, user_id, target_movie_id, target_movie_rating):
    # encode_input: embedding lookups + concat (glue in plain JAX)
    user_emb = jnp.take(prep["emb_user"], user_id, axis=0)             # (B, 78)
    movie_emb = jnp.take(prep["emb_movie"], target_movie_id, axis=0)   # (B, 63)
    B = user_id.shape[0]
    ones = jnp.ones((B, 1), jnp.float32)                               # carries b1
    feats = jnp.concatenate([user_emb, movie_emb, ones], axis=1)       # (B, 142)

    tb, b_pad = _batch_tiling(B)
    # pad batch -> b_pad and K 142 -> IN_PAD; NO transpose (kernel contracts last axes)
    x = jnp.pad(feats, ((0, b_pad - B), (0, IN_PAD - K_AUG))).astype(jnp.bfloat16)

    out_row = _mlp_pallas(x, prep["w1_t"], prep["w2_t"], prep["b2"],
                          prep["w3"], prep["b3"], tb=tb)               # (1, b_pad)

    out = out_row[0, :B].reshape(B, OUT_DIM)
    return out, target_movie_rating.astype(jnp.float32)


# ------------------------------ references ---------------------------------
def _reference_f32(params, user_id, target_movie_id, target_movie_rating):
    """Straight PyTorch-module semantics in f32 (BN applied explicitly, eval mode)."""
    x = jnp.concatenate([params["emb_user"][user_id],
                         params["emb_movie"][target_movie_id]], axis=1)
    hp = lax.Precision.HIGHEST
    h = jnp.dot(x, params["w1"], precision=hp) + params["b1"]
    h = (h - params["bn1_mean"]) / jnp.sqrt(params["bn1_var"] + BN_EPS) \
        * params["bn1_gamma"] + params["bn1_beta"]
    h = jnp.where(h > 0, h, LEAKY_SLOPE * h)
    h = jnp.dot(h, params["w2"], precision=hp) + params["b2"]
    h = (h - params["bn2_mean"]) / jnp.sqrt(params["bn2_var"] + BN_EPS) \
        * params["bn2_gamma"] + params["bn2_beta"]
    h = jnp.where(h > 0, h, LEAKY_SLOPE * h)
    h = jnp.dot(h, params["w3"], precision=hp) + params["b3"]
    return jax.nn.sigmoid(h), target_movie_rating.astype(jnp.float32)


def _reference_bf16(prep, user_id, target_movie_id, target_movie_rating):
    """Pure-JAX reference that emulates the kernel's folded weights and bf16 matmul
    inputs (f32 accumulation)."""
    B = user_id.shape[0]
    x = jnp.concatenate([prep["emb_user"][user_id],
                         prep["emb_movie"][target_movie_id],
                         jnp.ones((B, 1), jnp.float32)], axis=1)        # (B, 142)
    x16 = jnp.pad(x, ((0, 0), (0, IN_PAD - K_AUG))).astype(jnp.bfloat16)
    h1 = jnp.dot(x16, prep["w1_t"].T, preferred_element_type=jnp.float32)
    h1 = jnp.maximum(h1, LEAKY_SLOPE * h1)
    h2 = jnp.dot(h1.astype(jnp.bfloat16), prep["w2_t"].T,
                 preferred_element_type=jnp.float32) + prep["b2"][:, 0]
    h2 = jnp.maximum(h2, LEAKY_SLOPE * h2)
    logit = jnp.dot(h2, prep["w3"]) + prep["b3"][0]
    return jax.nn.sigmoid(logit), target_movie_rating.astype(jnp.float32)


if __name__ == "__main__":
    key = jax.random.PRNGKey(0)
    pkey, ik0, ik1, ik2 = jax.random.split(key, 4)

    B = 16
    num_users, num_movies = 50, 40
    params = init_params(pkey, num_users, num_movies)
    prep = prepare_inference_params(params)          # one-time weight prep

    # Only the fields of the original 12-tuple input that the module actually uses:
    user_id = jax.random.randint(ik0, (B,), 0, num_users + 1, dtype=jnp.int32)
    target_movie_id = jax.random.randint(ik1, (B,), 0, num_movies + 1, dtype=jnp.int32)
    target_movie_rating = jax.random.randint(ik2, (B,), 1, 6, dtype=jnp.int32)

    out, rating = bst_without_forward(prep, user_id, target_movie_id, target_movie_rating)
    jax.block_until_ready((out, rating))

    assert out.shape == (B, 1) and rating.shape == (B,)
    assert bool(jnp.all(jnp.isfinite(out)))

    # Tight check vs. a reference that emulates the kernel's folded bf16 numerics.
    ref16, ref_rating = _reference_bf16(prep, user_id, target_movie_id, target_movie_rating)
    assert jnp.allclose(out, ref16, atol=1e-3, rtol=5e-3), \
        float(jnp.max(jnp.abs(out - ref16)))
    # Loose check vs. the full-f32 (module-semantics) reference.
    ref32, _ = _reference_f32(params, user_id, target_movie_id, target_movie_rating)
    assert jnp.allclose(out, ref32, atol=2e-2, rtol=2e-2), \
        float(jnp.max(jnp.abs(out - ref32)))
    assert jnp.allclose(rating, ref_rating)

    print("KERNEL_OK")
</pallas_src>

<mosaic_0001>
module attributes {stable_mosaic.version = 11 : i64} {
  func.func @_mlp_kernel(%arg0: i32, %arg1: memref<128x256xbf16, #tpu.memory_space<vmem>>, %arg2: memref<512x256xbf16, #tpu.memory_space<vmem>>, %arg3: memref<256x512xbf16, #tpu.memory_space<vmem>>, %arg4: memref<256x1xf32, #tpu.memory_space<vmem>>, %arg5: memref<256x1xf32, #tpu.memory_space<vmem>>, %arg6: memref<1x1xf32, #tpu.memory_space<vmem>>, %arg7: memref<1x128xf32, #tpu.memory_space<vmem>>) attributes {dimension_semantics = [#tpu.dimension_semantics<parallel>], iteration_bounds = array<i64: 2>, scalar_prefetch = 0 : i64, scratch_operands = 0 : i64, tpu.core_type = #tpu.core_type<tc>, window_params = [{transform_indices = @transform_0, window_bounds = array<i64: 128, 256>}, {pipeline_mode = #tpu.pipeline_mode<synchronous>, transform_indices = @transform_1, window_bounds = array<i64: 512, 256>}, {pipeline_mode = #tpu.pipeline_mode<synchronous>, transform_indices = @transform_2, window_bounds = array<i64: 256, 512>}, {pipeline_mode = #tpu.pipeline_mode<synchronous>, transform_indices = @transform_3, window_bounds = array<i64: 256, 1>}, {pipeline_mode = #tpu.pipeline_mode<synchronous>, transform_indices = @transform_4, window_bounds = array<i64: 256, 1>}, {pipeline_mode = #tpu.pipeline_mode<synchronous>, transform_indices = @transform_5, window_bounds = array<i64: 1, 1>}, {transform_indices = @transform_6, window_bounds = array<i64: 1, 128>}]} {
    %c0 = arith.constant 0 : index
    %c0_0 = arith.constant 0 : index
    %0 = vector.load %arg2[%c0, %c0_0] : memref<512x256xbf16, #tpu.memory_space<vmem>>, vector<512x256xbf16>
    %c0_1 = arith.constant 0 : index
    %c0_2 = arith.constant 0 : index
    %1 = vector.load %arg1[%c0_1, %c0_2] : memref<128x256xbf16, #tpu.memory_space<vmem>>, vector<128x256xbf16>
    %cst = arith.constant dense<0.000000e+00> : vector<512x128xf32>
    %2 = tpu.matmul %0, %1, %cst {dimension_numbers = #tpu.dot_dimension_numbers<[1], [1], [0], [0], [0, 0, 1, 0], [], []>} : vector<512x256xbf16>, vector<128x256xbf16>, vector<512x128xf32> -> vector<512x128xf32>
    %cst_3 = arith.constant 0.00999999977 : f32
    %3 = vector.broadcast %cst_3 : f32 to vector<512x128xf32>
    %4 = arith.mulf %3, %2 : vector<512x128xf32>
    %5 = arith.maximumf %2, %4 : vector<512x128xf32>
    %c0_4 = arith.constant 0 : index
    %c0_5 = arith.constant 0 : index
    %6 = vector.load %arg3[%c0_4, %c0_5] : memref<256x512xbf16, #tpu.memory_space<vmem>>, vector<256x512xbf16>
    %7 = arith.truncf %5 : vector<512x128xf32> to vector<512x128xbf16>
    %cst_6 = arith.constant dense<0.000000e+00> : vector<256x128xf32>
    %8 = tpu.matmul %6, %7, %cst_6 {dimension_numbers = #tpu.dot_dimension_numbers<[1], [0], [0], [1], [0, 0, 1, 1], [], []>} : vector<256x512xbf16>, vector<512x128xbf16>, vector<256x128xf32> -> vector<256x128xf32>
    %c0_7 = arith.constant 0 : index
    %c0_8 = arith.constant 0 : index
    %9 = vector.load %arg4[%c0_7, %c0_8] : memref<256x1xf32, #tpu.memory_space<vmem>>, vector<256x1xf32>
    %10 = vector.broadcast %9 : vector<256x1xf32> to vector<256x128xf32>
    %11 = arith.addf %8, %10 : vector<256x128xf32>
    %cst_9 = arith.constant 0.00999999977 : f32
    %12 = vector.broadcast %cst_9 : f32 to vector<256x128xf32>
    %13 = arith.mulf %12, %11 : vector<256x128xf32>
    %14 = arith.maximumf %11, %13 : vector<256x128xf32>
    %c0_10 = arith.constant 0 : index
    %c0_11 = arith.constant 0 : index
    %15 = vector.load %arg5[%c0_10, %c0_11] : memref<256x1xf32, #tpu.memory_space<vmem>>, vector<256x1xf32>
    %16 = vector.broadcast %15 : vector<256x1xf32> to vector<256x128xf32>
    %17 = arith.mulf %14, %16 : vector<256x128xf32>
    %cst_12 = arith.constant dense<0.000000e+00> : vector<128xf32>
    %18 = vector.multi_reduction <add>, %17, %cst_12 [0] : vector<256x128xf32> to vector<128xf32>
    %19 = vector.shape_cast %18 : vector<128xf32> to vector<1x128xf32>
    %c0_13 = arith.constant 0 : index
    %c0_14 = arith.constant 0 : index
    %20 = vector.load %arg6[%c0_13, %c0_14] : memref<1x1xf32, #tpu.memory_space<vmem>>, vector<1x1xf32>
    %21 = vector.broadcast %20 : vector<1x1xf32> to vector<1x128xf32>
    %22 = arith.addf %19, %21 : vector<1x128xf32>
    %23 = math.absf %22 : vector<1x128xf32>
    %cst_15 = arith.constant 0.000000e+00 : f32
    %24 = vector.broadcast %cst_15 : f32 to vector<1x128xf32>
    %25 = arith.subf %24, %23 : vector<1x128xf32>
    %26 = math.exp %25 : vector<1x128xf32>
    %cst_16 = arith.constant 1.000000e+00 : f32
    %27 = vector.broadcast %cst_16 : f32 to vector<1x128xf32>
    %28 = arith.addf %27, %26 : vector<1x128xf32>
    %29 = tpu.reciprocal %28 : vector<1x128xf32> -> vector<1x128xf32>
    %cst_17 = arith.constant 0.000000e+00 : f32
    %30 = vector.broadcast %cst_17 : f32 to vector<1x128xf32>
    %31 = arith.cmpf oge, %22, %30 : vector<1x128xf32>
    %32 = arith.mulf %26, %29 : vector<1x128xf32>
    %33 = arith.select %31, %29, %32 : vector<1x128xi1>, vector<1x128xf32>
    %c0_18 = arith.constant 0 : index
    %c0_19 = arith.constant 0 : index
    %34 = vector.load %arg7[%c0_18, %c0_19] : memref<1x128xf32, #tpu.memory_space<vmem>>, vector<1x128xf32>
    tpu.vector_store %arg7[%c0_18, %c0_19], %33 {strides = array<i32>} : memref<1x128xf32, #tpu.memory_space<vmem>>, vector<1x128xf32>,
    return
  }
  func.func @transform_0(%arg0: i32) -> (i32, i32) {
    %c0_i32 = arith.constant 0 : i32
    %c0_i32_0 = arith.constant 0 : i32
    return %arg0, %c0_i32 : i32, i32
  }
  func.func @transform_1(%arg0: i32) -> (i32, i32) {
    %c0_i32 = arith.constant 0 : i32
    %c0_i32_0 = arith.constant 0 : i32
    %c0_i32_1 = arith.constant 0 : i32
    return %c0_i32, %c0_i32_0 : i32, i32
  }
  func.func @transform_2(%arg0: i32) -> (i32, i32) {
    %c0_i32 = arith.constant 0 : i32
    %c0_i32_0 = arith.constant 0 : i32
    %c0_i32_1 = arith.constant 0 : i32
    return %c0_i32, %c0_i32_0 : i32, i32
  }
  func.func @transform_3(%arg0: i32) -> (i32, i32) {
    %c0_i32 = arith.constant 0 : i32
    %c0_i32_0 = arith.constant 0 : i32
    %c0_i32_1 = arith.constant 0 : i32
    return %c0_i32, %c0_i32_0 : i32, i32
  }
  func.func @transform_4(%arg0: i32) -> (i32, i32) {
    %c0_i32 = arith.constant 0 : i32
    %c0_i32_0 = arith.constant 0 : i32
    %c0_i32_1 = arith.constant 0 : i32
    return %c0_i32, %c0_i32_0 : i32, i32
  }
  func.func @transform_5(%arg0: i32) -> (i32, i32) {
    %c0_i32 = arith.constant 0 : i32
    %c0_i32_0 = arith.constant 0 : i32
    %c0_i32_1 = arith.constant 0 : i32
    return %c0_i32, %c0_i32_0 : i32, i32
  }
  func.func @transform_6(%arg0: i32) -> (i32, i32) {
    %c0_i32 = arith.constant 0 : i32
    %c0_i32_0 = arith.constant 0 : i32
    return %c0_i32, %arg0 : i32, i32
  }
}

</mosaic_0001>

<llo_original>
// kernel: bst_without_forward.1
$region0: #{bst_without_forward.1}
  #allocation0 [shape = 'u32[]', space=smem, size = 0x4, offset = 0x4, fixed_abs, tag = 'smem constant byte address 0x4 - core index']
  #allocation1 [shape = 'u32[72,128]{1,0:T(1,128)}', space=vmem, size = 0x9000, scoped, tag = 'internal scratch']
  #allocation2 [shape = 'f32[1,1]{1,0:T(1,128)S(1)}', space=vmem, size = 0x200, scoped, tag = 'scoped memory for bst_without_forward.1']
  %s0 = inlined_call_operand.vmem [shape: bf16[256,256], index: 0, kind: input, shape index: {}]
  %s1 = inlined_call_operand.vmem [shape: bf16[512,256], index: 1, kind: input, shape index: {}]
  %s2 = inlined_call_operand.hbm [shape: bf16[256,512], index: 2, kind: input, shape index: {}]
  %s3 = inlined_call_operand.vmem [shape: f32[256,1], index: 3, kind: input, shape index: {}]
  %s4 = inlined_call_operand.vmem [shape: f32[256,1], index: 4, kind: input, shape index: {}]
  %s5 = inlined_call_operand.<no memory space> [shape: f32[1,1], index: 5, kind: input, shape index: {}]
  %s6 = inlined_call_operand.vmem [shape: f32[1,256], index: 6, kind: output, shape index: {}]
  %s7 = sld [smem:[#allocation0]]
  $region61: #{bst_without_forward.1} parent=0
    _
  %s9 = ssub.s32 1, %s7
  %s10 = scalar_select 0, %s9, %s7
  %v11 = vstv %s5
  %12 = vst [vmem:[#allocation2] sm:$0x1] %v11
  $region1: #{bst_without_forward.1} parent=0
    #allocation3 [shape = 'u8[262144]{0}', space=vmem, size = 0x40000, scoped, tag = 'input window, operand 2, single buffered']
    #allocation4 [shape = 's32[2]{0}', space=sflag, size = 0x8, scoped, tag = 'scoped memory for bst_without_forward.1']
    %13 = vsyncpa [#allocation4], 0
    loop: start=0, step=1, limit=4
    $region2: #{bst_without_forward.1} parent=1 // loop_pre_header
      _
    $region3: #{bst_without_forward.1} parent=1 // loop_header
      %s15 = sphi 0, %s19
      %p16 = scmp.ge.s32.totalorder %s15, 4
      %s25 = sphi 0, %s27
      %s28 = sphi 0, %s25
      %s29 = sphi 0, %s28
      %s45 = sphi 0, %s29
      %s49 = sphi 0, %s49
      %s51 = sphi 0, %s49
      %s52 = sphi 0, %s51
      %s66 = sphi 0, %s52
      %s70 = sphi 0, %s70
      %s72 = sphi 0, %s70
      %s73 = sphi 0, %s72
      %s87 = sphi 0, %s73
      %s91 = sphi 0, %s91
      %s93 = sphi 0, %s91
      %s94 = sphi 0, %s93
      %s108 = sphi 0, %s94
      %s112 = sphi 0, %s112
      %s114 = sphi 0, %s112
      %s115 = sphi 0, %s114
      %s129 = sphi 0, %s115
      %s133 = sphi 0, %s133
      %s135 = sphi 0, %s133
      %s136 = sphi 0, %s135
      %s150 = sphi 0, %s136
      %s156 = sphi 0, %s158
      %s159 = sphi 0, %s156
      %s160 = sphi 0, %s159
      %s176 = sphi 0, %s160
    $region4: #{bst_without_forward.1} parent=1 // loop_header_branch
      %18 = sbr.rel (%p16) target = $region8
    $region5: #{bst_without_forward.1} parent=1 // loop_body
      %s20 = ssub.s32 %s15, 1
      %s21 = ssub.s32 %s15, 2
      %s22 = sadd.s32 %s15, 1
      %s23 = ssub.s32 %s15, %s22
      %p24 = scmp.eq.s32.totalorder %s23, 0
      %s26 = sadd.s32 %s25, 1
      %s27 = scalar_select %p24, %s25, %s26
      %p30 = pneg %p24
      %p31 = scmp.eq.s32.totalorder %s15, 1
      %p32 = por %p30, %p31
      %p33 = scmp.ne.s32.totalorder %s25, %s28
      %p34 = scmp.eq.s32.totalorder %s15, 0
      %p35 = por %p33, %p34
      %p36 = scmp.ne.s32.totalorder %s25, %s28
      %p37 = scmp.eq.s32.totalorder %s20, 1
      %p38 = por %p36, %p37
      %p39 = scmp.ne.s32.totalorder %s28, %s29
      %p40 = scmp.eq.s32.totalorder %s20, 0
      %p41 = por %p39, %p40
      %p42 = scmp.ne.s32.totalorder %s28, %s29
      %p43 = scmp.eq.s32.totalorder %s21, 1
      %p44 = por %p42, %p43
      %p46 = scmp.ne.s32.totalorder %s29, %s45
      %p47 = scmp.eq.s32.totalorder %s21, 0
      %p48 = por %p46, %p47
      %s50 = sadd.s32 %s49, 1
      %p53 = scmp.eq.s32.totalorder %s15, 1
      %p54 = scmp.ne.s32.totalorder %s49, %s51
      %p55 = scmp.eq.s32.totalorder %s15, 0
      %p56 = por %p54, %p55
      %p57 = scmp.ne.s32.totalorder %s49, %s51
      %p58 = scmp.eq.s32.totalorder %s20, 1
      %p59 = por %p57, %p58
      %p60 = scmp.ne.s32.totalorder %s51, %s52
      %p61 = scmp.eq.s32.totalorder %s20, 0
      %p62 = por %p60, %p61
      %p63 = scmp.ne.s32.totalorder %s51, %s52
      %p64 = scmp.eq.s32.totalorder %s21, 1
      %p65 = por %p63, %p64
      %p67 = scmp.ne.s32.totalorder %s52, %s66
      %p68 = scmp.eq.s32.totalorder %s21, 0
      %p69 = por %p67, %p68
      %s71 = sadd.s32 %s70, 1
      %p74 = scmp.eq.s32.totalorder %s15, 1
      %p75 = scmp.ne.s32.totalorder %s70, %s72
      %p76 = scmp.eq.s32.totalorder %s15, 0
      %p77 = por %p75, %p76
      %p78 = scmp.ne.s32.totalorder %s70, %s72
      %p79 = scmp.eq.s32.totalorder %s20, 1
      %p80 = por %p78, %p79
      %p81 = scmp.ne.s32.totalorder %s72, %s73
      %p82 = scmp.eq.s32.totalorder %s20, 0
      %p83 = por %p81, %p82
      %p84 = scmp.ne.s32.totalorder %s72, %s73
      %p85 = scmp.eq.s32.totalorder %s21, 1
      %p86 = por %p84, %p85
      %p88 = scmp.ne.s32.totalorder %s73, %s87
      %p89 = scmp.eq.s32.totalorder %s21, 0
      %p90 = por %p88, %p89
      %s92 = sadd.s32 %s91, 1
      %p95 = scmp.eq.s32.totalorder %s15, 1
      %p96 = scmp.ne.s32.totalorder %s91, %s93
      %p97 = scmp.eq.s32.totalorder %s15, 0
      %p98 = por %p96, %p97
      %p99 = scmp.ne.s32.totalorder %s91, %s93
      %p100 = scmp.eq.s32.totalorder %s20, 1
      %p101 = por %p99, %p100
      %p102 = scmp.ne.s32.totalorder %s93, %s94
      %p103 = scmp.eq.s32.totalorder %s20, 0
      %p104 = por %p102, %p103
      %p105 = scmp.ne.s32.totalorder %s93, %s94
      %p106 = scmp.eq.s32.totalorder %s21, 1
      %p107 = por %p105, %p106
      %p109 = scmp.ne.s32.totalorder %s94, %s108
      %p110 = scmp.eq.s32.totalorder %s21, 0
      %p111 = por %p109, %p110
      %s113 = sadd.s32 %s112, 1
      %p116 = scmp.eq.s32.totalorder %s15, 1
      %p117 = scmp.ne.s32.totalorder %s112, %s114
      %p118 = scmp.eq.s32.totalorder %s15, 0
      %p119 = por %p117, %p118
      %p120 = scmp.ne.s32.totalorder %s112, %s114
      %p121 = scmp.eq.s32.totalorder %s20, 1
      %p122 = por %p120, %p121
      %p123 = scmp.ne.s32.totalorder %s114, %s115
      %p124 = scmp.eq.s32.totalorder %s20, 0
      %p125 = por %p123, %p124
      %p126 = scmp.ne.s32.totalorder %s114, %s115
      %p127 = scmp.eq.s32.totalorder %s21, 1
      %p128 = por %p126, %p127
      %p130 = scmp.ne.s32.totalorder %s115, %s129
      %p131 = scmp.eq.s32.totalorder %s21, 0
      %p132 = por %p130, %p131
      %s134 = sadd.s32 %s133, 1
      %p137 = scmp.eq.s32.totalorder %s15, 1
      %p138 = scmp.ne.s32.totalorder %s133, %s135
      %p139 = scmp.eq.s32.totalorder %s15, 0
      %p140 = por %p138, %p139
      %p141 = scmp.ne.s32.totalorder %s133, %s135
      %p142 = scmp.eq.s32.totalorder %s20, 1
      %p143 = por %p141, %p142
      %p144 = scmp.ne.s32.totalorder %s135, %s136
      %p145 = scmp.eq.s32.totalorder %s20, 0
      %p146 = por %p144, %p145
      %p147 = scmp.ne.s32.totalorder %s135, %s136
      %p148 = scmp.eq.s32.totalorder %s21, 1
      %p149 = por %p147, %p148
      %p151 = scmp.ne.s32.totalorder %s136, %s150
      %p152 = scmp.eq.s32.totalorder %s21, 0
      %p153 = por %p151, %p152
      %s154 = ssub.s32 %s15, %s22
      %p155 = scmp.eq.s32.totalorder %s154, 0
      %s157 = sadd.s32 %s156, 1
      %s158 = scalar_select %p155, %s156, %s157
      %p161 = pneg %p155
      %p162 = scmp.eq.s32.totalorder %s15, 1
      %p163 = por %p161, %p162
      %p164 = scmp.ne.s32.totalorder %s156, %s159
      %p165 = scmp.eq.s32.totalorder %s15, 0
      %p166 = por %p164, %p165
      %p167 = scmp.ne.s32.totalorder %s156, %s159
      %p168 = scmp.eq.s32.totalorder %s20, 1
      %p169 = por %p167, %p168
      %p170 = scmp.ne.s32.totalorder %s159, %s160
      %p171 = scmp.eq.s32.totalorder %s20, 0
      %p172 = por %p170, %p171
      %p173 = scmp.ne.s32.totalorder %s159, %s160
      %p174 = scmp.eq.s32.totalorder %s21, 1
      %p175 = por %p173, %p174
      %p177 = scmp.ne.s32.totalorder %s160, %s176
      %p178 = scmp.eq.s32.totalorder %s21, 0
      %p179 = por %p177, %p178
      %p180 = scmp.le.s32.totalorder 1, %s15
      %p181 = scmp.lt.s32.totalorder %s15, 3
      %p182 = pnand %p180, %p181
      %p183 = pneg %p182
      // Predicated region
      $region9: #{bst_without_forward.1} parent=5 // pred_check
        _
      $region10: #{bst_without_forward.1} parent=5 // pred_check_branch
        %185 = sbr.rel (%p182) target = $region12
      $region11: #{bst_without_forward.1} parent=5 // pred_region
        %s186 = ssub.s32 %s15, 1
        // Predicated region
        $region13: #{bst_without_forward.1} parent=11 // pred_check
          %p187 = pneg %p62
        $region14: #{bst_without_forward.1} parent=11 // pred_check_branch
          %189 = sbr.rel (%p187) target = $region16
        $region15: #{bst_without_forward.1} parent=11 // pred_region
          _
        $region16: #{bst_without_forward.1} parent=11 // pred_fallthru
          _
        // Predicated region
        $region17: #{bst_without_forward.1} parent=11 // pred_check
          %p190 = pneg %p83
        $region18: #{bst_without_forward.1} parent=11 // pred_check_branch
          %192 = sbr.rel (%p190) target = $region20
        $region19: #{bst_without_forward.1} parent=11 // pred_region
          %194 = vsyncadd [#allocation4], 0
          %s195 = sshll.u32 %s2, 4
          %s196 = int_to_ptr.hbm [resolvable:$true] %s195
          %s197 = sshll.u32 [#allocation3], 4
          %s198 = int_to_ptr.vmem [resolvable:$true] %s197
          %203 = dma.hbm_to_vmem [thread:$0]  %s196, 8192, %s198, [#allocation4], 256, 256, 16
        $region20: #{bst_without_forward.1} parent=11 // pred_fallthru
          _
        // Predicated region
        $region21: #{bst_without_forward.1} parent=11 // pred_check
          %p204 = pneg %p104
        $region22: #{bst_without_forward.1} parent=11 // pred_check_branch
          %206 = sbr.rel (%p204) target = $region24
        $region23: #{bst_without_forward.1} parent=11 // pred_region
          _
        $region24: #{bst_without_forward.1} parent=11 // pred_fallthru
          _
        // Predicated region
        $region25: #{bst_without_forward.1} parent=11 // pred_check
          %p207 = pneg %p125
        $region26: #{bst_without_forward.1} parent=11 // pred_check_branch
          %209 = sbr.rel (%p207) target = $region28
        $region27: #{bst_without_forward.1} parent=11 // pred_region
          _
        $region28: #{bst_without_forward.1} parent=11 // pred_fallthru
          _
        // Predicated region
        $region29: #{bst_without_forward.1} parent=11 // pred_check
          %p210 = pneg %p146
        $region30: #{bst_without_forward.1} parent=11 // pred_check_branch
          %212 = sbr.rel (%p210) target = $region32
        $region31: #{bst_without_forward.1} parent=11 // pred_region
          _
        $region32: #{bst_without_forward.1} parent=11 // pred_fallthru
          _
      $region12: #{bst_without_forward.1} parent=5 // pred_fallthru
        _
      %p213 = scmp.lt.s32.totalorder %s15, 2
      // Predicated region
      $region33: #{bst_without_forward.1} parent=5 // pred_check
        %p214 = pneg %p213
      $region34: #{bst_without_forward.1} parent=5 // pred_check_branch
        %216 = sbr.rel (%p214) target = $region36
      $region35: #{bst_without_forward.1} parent=5 // pred_region
        // Predicated region
        $region37: #{bst_without_forward.1} parent=35 // pred_check
          %p217 = pneg %p35
        $region38: #{bst_without_forward.1} parent=35 // pred_check_branch
          %219 = sbr.rel (%p217) target = $region40
        $region39: #{bst_without_forward.1} parent=35 // pred_region
          %s220 = smul.u32 16, %s15
          %p221 = scmp.lt.s32.totalorder %s220, 31
          %s222 = scalar_select %p221, %s220, 31
          %s223 = smul.addr %s222, 2
          %s224 = smul.addr %s223, 4
          %s225 = scalar_lea.vmem %s0, %s224
          %s226 = smul.u32 16, %s15
        $region40: #{bst_without_forward.1} parent=35 // pred_fallthru
          _
      $region36: #{bst_without_forward.1} parent=5 // pred_fallthru
        _
      %p227 = scmp.le.s32.totalorder 1, %s15
      %p228 = scmp.lt.s32.totalorder %s15, 3
      %p229 = pnand %p227, %p228
      %p230 = pneg %p229
      // Predicated region
      $region41: #{bst_without_forward.1} parent=5 // pred_check
        _
      $region42: #{bst_without_forward.1} parent=5 // pred_check_branch
        %232 = sbr.rel (%p229) target = $region44
      $region43: #{bst_without_forward.1} parent=5 // pred_region
        %s233 = ssub.s32 %s15, 1
        // Predicated region
        $region45: #{bst_without_forward.1} parent=43 // pred_check
          %p234 = pneg %p83
        $region46: #{bst_without_forward.1} parent=43 // pred_check_branch
          %236 = sbr.rel (%p234) target = $region48
        $region47: #{bst_without_forward.1} parent=43 // pred_region
          %238 = dma.done [#allocation4], 8192
        $region48: #{bst_without_forward.1} parent=43 // pred_fallthru
          _
        %s239 = smul.u32 16, %s20
        %p240 = scmp.lt.s32.totalorder %s239, 31
        %s241 = scalar_select %p240, %s239, 31
        %s242 = smul.addr %s241, 2
        %s243 = smul.addr %s242, 4
        %s244 = scalar_lea.vmem %s0, %s243
        %p245 = pneg %p41
        %p246 = pneg %p38
        %p247 = pneg %p62
        %p248 = pneg %p59
        %p249 = pneg %p83
        %p250 = pneg %p80
        %p251 = pneg %p104
        %p252 = pneg %p101
        %p253 = pneg %p125
        %p254 = pneg %p122
        %p255 = pneg %p146
        %p256 = pneg %p143
        %p257 = pneg %p172
        %p258 = pneg %p169
        %p259 = scmp.lt.s32.totalorder %s20, 1
        %s260 = scalar_select %p259, %s20, 1
        %s261 = scalar_lea.vmem %s6, %s260
        %s262 = smul.u32 16, %s20
        %p263 = scmp.lt.s32.totalorder %s262, 31
        %s264 = scalar_select %p263, %s262, 31
        %s265 = smul.addr %s264, 2
        %s266 = smul.addr %s265, 4
        %s267 = scalar_lea.vmem %s0, %s266
        %s268 = smul.u32 16, %s20
        %p269 = scmp.lt.s32.totalorder %s20, 1
        %s270 = scalar_select %p269, %s20, 1
        %s271 = scalar_lea.vmem %s6, %s270
        %v272 = vld [vmem:[%s1] sm:$0xff]
        %v273 = vld [vmem:[%s1 + $0x8] sm:$0xff]
        %v274 = vld [vmem:[%s1 + $0x10] sm:$0xff]
        %v275 = vld [vmem:[%s1 + $0x18] sm:$0xff]
        %v276 = vld [vmem:[%s1 + $0x20] sm:$0xff]
        %v277 = vld [vmem:[%s1 + $0x28] sm:$0xff]
        %v278 = vld [vmem:[%s1 + $0x30] sm:$0xff]
        %v279 = vld [vmem:[%s1 + $0x38] sm:$0xff]
        %v280 = vld [vmem:[%s1 + $0x40] sm:$0xff]
        %v281 = vld [vmem:[%s1 + $0x48] sm:$0xff]
        %v282 = vld [vmem:[%s1 + $0x50] sm:$0xff]
        %v283 = vld [vmem:[%s1 + $0x58] sm:$0xff]
        %v284 = vld [vmem:[%s1 + $0x60] sm:$0xff]
        %v285 = vld [vmem:[%s1 + $0x68] sm:$0xff]
        %v286 = vld [vmem:[%s1 + $0x70] sm:$0xff]
        %v287 = vld [vmem:[%s1 + $0x78] sm:$0xff]
        %v288 = vld [vmem:[%s1 + $0x80] sm:$0xff]
        %v289 = vld [vmem:[%s1 + $0x88] sm:$0xff]
        %v290 = vld [vmem:[%s1 + $0x90] sm:$0xff]
        %v291 = vld [vmem:[%s1 + $0x98] sm:$0xff]
        %v292 = vld [vmem:[%s1 + $0xa0] sm:$0xff]
        %v293 = vld [vmem:[%s1 + $0xa8] sm:$0xff]
        %v294 = vld [vmem:[%s1 + $0xb0] sm:$0xff]
        %v295 = vld [vmem:[%s1 + $0xb8] sm:$0xff]
        %v296 = vld [vmem:[%s1 + $0xc0] sm:$0xff]
        %v297 = vld [vmem:[%s1 + $0xc8] sm:$0xff]
        %v298 = vld [vmem:[%s1 + $0xd0] sm:$0xff]
        %v299 = vld [vmem:[%s1 + $0xd8] sm:$0xff]
        %v300 = vld [vmem:[%s1 + $0xe0] sm:$0xff]
        %v301 = vld [vmem:[%s1 + $0xe8] sm:$0xff]
        %v302 = vld [vmem:[%s1 + $0xf0] sm:$0xff]
        %v303 = vld [vmem:[%s1 + $0xf8] sm:$0xff]
        %v304 = vld [vmem:[%s1 + $0x100] sm:$0xff]
        %v305 = vld [vmem:[%s1 + $0x108] sm:$0xff]
        %v306 = vld [vmem:[%s1 + $0x110] sm:$0xff]
        %v307 = vld [vmem:[%s1 + $0x118] sm:$0xff]
        %v308 = vld [vmem:[%s1 + $0x120] sm:$0xff]
        %v309 = vld [vmem:[%s1 + $0x128] sm:$0xff]
        %v310 = vld [vmem:[%s1 + $0x130] sm:$0xff]
        %v311 = vld [vmem:[%s1 + $0x138] sm:$0xff]
        %v312 = vld [vmem:[%s1 + $0x140] sm:$0xff]
        %v313 = vld [vmem:[%s1 + $0x148] sm:$0xff]
        %v314 = vld [vmem:[%s1 + $0x150] sm:$0xff]
        %v315 = vld [vmem:[%s1 + $0x158] sm:$0xff]
        %v316 = vld [vmem:[%s1 + $0x160] sm:$0xff]
        %v317 = vld [vmem:[%s1 + $0x168] sm:$0xff]
        %v318 = vld [vmem:[%s1 + $0x170] sm:$0xff]
        %v319 = vld [vmem:[%s1 + $0x178] sm:$0xff]
        %v320 = vld [vmem:[%s1 + $0x180] sm:$0xff]
        %v321 = vld [vmem:[%s1 + $0x188] sm:$0xff]
        %v322 = vld [vmem:[%s1 + $0x190] sm:$0xff]
        %v323 = vld [vmem:[%s1 + $0x198] sm:$0xff]
        %v324 = vld [vmem:[%s1 + $0x1a0] sm:$0xff]
        %v325 = vld [vmem:[%s1 + $0x1a8] sm:$0xff]
        %v326 = vld [vmem:[%s1 + $0x1b0] sm:$0xff]
        %v327 = vld [vmem:[%s1 + $0x1b8] sm:$0xff]
        %v328 = vld [vmem:[%s1 + $0x1c0] sm:$0xff]
        %v329 = vld [vmem:[%s1 + $0x1c8] sm:$0xff]
        %v330 = vld [vmem:[%s1 + $0x1d0] sm:$0xff]
        %v331 = vld [vmem:[%s1 + $0x1d8] sm:$0xff]
        %v332 = vld [vmem:[%s1 + $0x1e0] sm:$0xff]
        %v333 = vld [vmem:[%s1 + $0x1e8] sm:$0xff]
        %v334 = vld [vmem:[%s1 + $0x1f0] sm:$0xff]
        %v335 = vld [vmem:[%s1 + $0x1f8] sm:$0xff]
        %v336 = vld [vmem:[%s267] sm:$0xff]
        %v337 = vld [vmem:[%s267 + $0x8] sm:$0xff]
        %v338 = vld [vmem:[%s267 + $0x10] sm:$0xff]
        %v339 = vld [vmem:[%s267 + $0x18] sm:$0xff]
        %v340 = vld [vmem:[%s267 + $0x20] sm:$0xff]
        %v341 = vld [vmem:[%s267 + $0x28] sm:$0xff]
        %v342 = vld [vmem:[%s267 + $0x30] sm:$0xff]
        %v343 = vld [vmem:[%s267 + $0x38] sm:$0xff]
        %v344 = vld [vmem:[%s267 + $0x40] sm:$0xff]
        %v345 = vld [vmem:[%s267 + $0x48] sm:$0xff]
        %v346 = vld [vmem:[%s267 + $0x50] sm:$0xff]
        %v347 = vld [vmem:[%s267 + $0x58] sm:$0xff]
        %v348 = vld [vmem:[%s267 + $0x60] sm:$0xff]
        %v349 = vld [vmem:[%s267 + $0x68] sm:$0xff]
        %v350 = vld [vmem:[%s267 + $0x70] sm:$0xff]
        %v351 = vld [vmem:[%s267 + $0x78] sm:$0xff]
        %v416 = vunpack.c.l.b16 %v272
        %v417 = vunpack.c.h.b16 %v272
        %v418 = vunpack.c.l.b16 %v273
        %v419 = vunpack.c.h.b16 %v273
        %v420 = vunpack.c.l.b16 %v274
        %v421 = vunpack.c.h.b16 %v274
        %v422 = vunpack.c.l.b16 %v275
        %v423 = vunpack.c.h.b16 %v275
        %v424 = vunpack.c.l.b16 %v276
        %v425 = vunpack.c.h.b16 %v276
        %v426 = vunpack.c.l.b16 %v277
        %v427 = vunpack.c.h.b16 %v277
        %v428 = vunpack.c.l.b16 %v278
        %v429 = vunpack.c.h.b16 %v278
        %v430 = vunpack.c.l.b16 %v279
        %v431 = vunpack.c.h.b16 %v279
        %v432 = vunpack.c.l.b16 %v280
        %v433 = vunpack.c.h.b16 %v280
        %v434 = vunpack.c.l.b16 %v281
        %v435 = vunpack.c.h.b16 %v281
        %v436 = vunpack.c.l.b16 %v282
        %v437 = vunpack.c.h.b16 %v282
        %v438 = vunpack.c.l.b16 %v283
        %v439 = vunpack.c.h.b16 %v283
        %v440 = vunpack.c.l.b16 %v284
        %v441 = vunpack.c.h.b16 %v284
        %v442 = vunpack.c.l.b16 %v285
        %v443 = vunpack.c.h.b16 %v285
        %v444 = vunpack.c.l.b16 %v286
        %v445 = vunpack.c.h.b16 %v286
        %v446 = vunpack.c.l.b16 %v287
        %v447 = vunpack.c.h.b16 %v287
        %v448 = vunpack.c.l.b16 %v288
        %v449 = vunpack.c.h.b16 %v288
        %v450 = vunpack.c.l.b16 %v289
        %v451 = vunpack.c.h.b16 %v289
        %v452 = vunpack.c.l.b16 %v290
        %v453 = vunpack.c.h.b16 %v290
        %v454 = vunpack.c.l.b16 %v291
        %v455 = vunpack.c.h.b16 %v291
        %v456 = vunpack.c.l.b16 %v292
        %v457 = vunpack.c.h.b16 %v292
        %v458 = vunpack.c.l.b16 %v293
        %v459 = vunpack.c.h.b16 %v293
        %v460 = vunpack.c.l.b16 %v294
        %v461 = vunpack.c.h.b16 %v294
        %v462 = vunpack.c.l.b16 %v295
        %v463 = vunpack.c.h.b16 %v295
        %v464 = vunpack.c.l.b16 %v296
        %v465 = vunpack.c.h.b16 %v296
        %v466 = vunpack.c.l.b16 %v297
        %v467 = vunpack.c.h.b16 %v297
        %v468 = vunpack.c.l.b16 %v298
        %v469 = vunpack.c.h.b16 %v298
        %v470 = vunpack.c.l.b16 %v299
        %v471 = vunpack.c.h.b16 %v299
        %v472 = vunpack.c.l.b16 %v300
        %v473 = vunpack.c.h.b16 %v300
        %v474 = vunpack.c.l.b16 %v301
        %v475 = vunpack.c.h.b16 %v301
        %v476 = vunpack.c.l.b16 %v302
        %v477 = vunpack.c.h.b16 %v302
        %v478 = vunpack.c.l.b16 %v303
        %v479 = vunpack.c.h.b16 %v303
        %v480 = vunpack.c.l.b16 %v304
        %v481 = vunpack.c.h.b16 %v304
        %v482 = vunpack.c.l.b16 %v305
        %v483 = vunpack.c.h.b16 %v305
        %v484 = vunpack.c.l.b16 %v306
        %v485 = vunpack.c.h.b16 %v306
        %v486 = vunpack.c.l.b16 %v307
        %v487 = vunpack.c.h.b16 %v307
        %v488 = vunpack.c.l.b16 %v308
        %v489 = vunpack.c.h.b16 %v308
        %v490 = vunpack.c.l.b16 %v309
        %v491 = vunpack.c.h.b16 %v309
        %v492 = vunpack.c.l.b16 %v310
        %v493 = vunpack.c.h.b16 %v310
        %v494 = vunpack.c.l.b16 %v311
        %v495 = vunpack.c.h.b16 %v311
        %v496 = vunpack.c.l.b16 %v312
        %v497 = vunpack.c.h.b16 %v312
        %v498 = vunpack.c.l.b16 %v313
        %v499 = vunpack.c.h.b16 %v313
        %v500 = vunpack.c.l.b16 %v314
        %v501 = vunpack.c.h.b16 %v314
        %v502 = vunpack.c.l.b16 %v315
        %v503 = vunpack.c.h.b16 %v315
        %v504 = vunpack.c.l.b16 %v316
        %v505 = vunpack.c.h.b16 %v316
        %v506 = vunpack.c.l.b16 %v317
        %v507 = vunpack.c.h.b16 %v317
        %v508 = vunpack.c.l.b16 %v318
        %v509 = vunpack.c.h.b16 %v318
        %v510 = vunpack.c.l.b16 %v319
        %v511 = vunpack.c.h.b16 %v319
        %v512 = vunpack.c.l.b16 %v320
        %v513 = vunpack.c.h.b16 %v320
        %v514 = vunpack.c.l.b16 %v321
        %v515 = vunpack.c.h.b16 %v321
        %v516 = vunpack.c.l.b16 %v322
        %v517 = vunpack.c.h.b16 %v322
        %v518 = vunpack.c.l.b16 %v323
        %v519 = vunpack.c.h.b16 %v323
        %v520 = vunpack.c.l.b16 %v324
        %v521 = vunpack.c.h.b16 %v324
        %v522 = vunpack.c.l.b16 %v325
        %v523 = vunpack.c.h.b16 %v325
        %v524 = vunpack.c.l.b16 %v326
        %v525 = vunpack.c.h.b16 %v326
        %v526 = vunpack.c.l.b16 %v327
        %v527 = vunpack.c.h.b16 %v327
        %v528 = vunpack.c.l.b16 %v328
        %v529 = vunpack.c.h.b16 %v328
        %v530 = vunpack.c.l.b16 %v329
        %v531 = vunpack.c.h.b16 %v329
        %v532 = vunpack.c.l.b16 %v330
        %v533 = vunpack.c.h.b16 %v330
        %v534 = vunpack.c.l.b16 %v331
        %v535 = vunpack.c.h.b16 %v331
        %v536 = vunpack.c.l.b16 %v332
        %v537 = vunpack.c.h.b16 %v332
        %v538 = vunpack.c.l.b16 %v333
        %v539 = vunpack.c.h.b16 %v333
        %v540 = vunpack.c.l.b16 %v334
        %v541 = vunpack.c.h.b16 %v334
        %v542 = vunpack.c.l.b16 %v335
        %v543 = vunpack.c.h.b16 %v335
        %v544 = vpack.c.b16 %v418, %v416
        %v545 = vpack.c.b16 %v419, %v417
        %v546 = vpack.c.b16 %v422, %v420
        %v547 = vpack.c.b16 %v423, %v421
        %v548 = vpack.c.b16 %v426, %v424
        %v549 = vpack.c.b16 %v427, %v425
        %v550 = vpack.c.b16 %v430, %v428
        %v551 = vpack.c.b16 %v431, %v429
        %v552 = vpack.c.b16 %v434, %v432
        %v553 = vpack.c.b16 %v435, %v433
        %v554 = vpack.c.b16 %v438, %v436
        %v555 = vpack.c.b16 %v439, %v437
        %v556 = vpack.c.b16 %v442, %v440
        %v557 = vpack.c.b16 %v443, %v441
        %v558 = vpack.c.b16 %v446, %v444
        %v559 = vpack.c.b16 %v447, %v445
        %v560 = vpack.c.b16 %v450, %v448
        %v561 = vpack.c.b16 %v451, %v449
        %v562 = vpack.c.b16 %v454, %v452
        %v563 = vpack.c.b16 %v455, %v453
        %v564 = vpack.c.b16 %v458, %v456
        %v565 = vpack.c.b16 %v459, %v457
        %v566 = vpack.c.b16 %v462, %v460
        %v567 = vpack.c.b16 %v463, %v461
        %v568 = vpack.c.b16 %v466, %v464
        %v569 = vpack.c.b16 %v467, %v465
        %v570 = vpack.c.b16 %v470, %v468
        %v571 = vpack.c.b16 %v471, %v469
        %v572 = vpack.c.b16 %v474, %v472
        %v573 = vpack.c.b16 %v475, %v473
        %v574 = vpack.c.b16 %v478, %v476
        %v575 = vpack.c.b16 %v479, %v477
        %v576 = vpack.c.b16 %v482, %v480
        %v577 = vpack.c.b16 %v483, %v481
        %v578 = vpack.c.b16 %v486, %v484
        %v579 = vpack.c.b16 %v487, %v485
        %v580 = vpack.c.b16 %v490, %v488
        %v581 = vpack.c.b16 %v491, %v489
        %v582 = vpack.c.b16 %v494, %v492
        %v583 = vpack.c.b16 %v495, %v493
        %v584 = vpack.c.b16 %v498, %v496
        %v585 = vpack.c.b16 %v499, %v497
        %v586 = vpack.c.b16 %v502, %v500
        %v587 = vpack.c.b16 %v503, %v501
        %v588 = vpack.c.b16 %v506, %v504
        %v589 = vpack.c.b16 %v507, %v505
        %v590 = vpack.c.b16 %v510, %v508
        %v591 = vpack.c.b16 %v511, %v509
        %v592 = vpack.c.b16 %v514, %v512
        %v593 = vpack.c.b16 %v515, %v513
        %v594 = vpack.c.b16 %v518, %v516
        %v595 = vpack.c.b16 %v519, %v517
        %v596 = vpack.c.b16 %v522, %v520
        %v597 = vpack.c.b16 %v523, %v521
        %v598 = vpack.c.b16 %v526, %v524
        %v599 = vpack.c.b16 %v527, %v525
        %v600 = vpack.c.b16 %v530, %v528
        %v601 = vpack.c.b16 %v531, %v529
        %v602 = vpack.c.b16 %v534, %v532
        %v603 = vpack.c.b16 %v535, %v533
        %v604 = vpack.c.b16 %v538, %v536
        %v605 = vpack.c.b16 %v539, %v537
        %v606 = vpack.c.b16 %v542, %v540
        %v607 = vpack.c.b16 %v543, %v541
        %v688 = vunpack.c.l.b16 %v336
        %v689 = vunpack.c.h.b16 %v336
        %v690 = vunpack.c.l.b16 %v337
        %v691 = vunpack.c.h.b16 %v337
        %v692 = vunpack.c.l.b16 %v338
        %v693 = vunpack.c.h.b16 %v338
        %v694 = vunpack.c.l.b16 %v339
        %v695 = vunpack.c.h.b16 %v339
        %v696 = vunpack.c.l.b16 %v340
        %v697 = vunpack.c.h.b16 %v340
        %v698 = vunpack.c.l.b16 %v341
        %v699 = vunpack.c.h.b16 %v341
        %v700 = vunpack.c.l.b16 %v342
        %v701 = vunpack.c.h.b16 %v342
        %v702 = vunpack.c.l.b16 %v343
        %v703 = vunpack.c.h.b16 %v343
        %v704 = vunpack.c.l.b16 %v344
        %v705 = vunpack.c.h.b16 %v344
        %v706 = vunpack.c.l.b16 %v345
        %v707 = vunpack.c.h.b16 %v345
        %v708 = vunpack.c.l.b16 %v346
        %v709 = vunpack.c.h.b16 %v346
        %v710 = vunpack.c.l.b16 %v347
        %v711 = vunpack.c.h.b16 %v347
        %v712 = vunpack.c.l.b16 %v348
        %v713 = vunpack.c.h.b16 %v348
        %v714 = vunpack.c.l.b16 %v349
        %v715 = vunpack.c.h.b16 %v349
        %v716 = vunpack.c.l.b16 %v350
        %v717 = vunpack.c.h.b16 %v350
        %v718 = vunpack.c.l.b16 %v351
        %v719 = vunpack.c.h.b16 %v351
        %v720 = vpack.c.b16 %v690, %v688
        %v721 = vpack.c.b16 %v691, %v689
        %v722 = vpack.c.b16 %v694, %v692
        %v723 = vpack.c.b16 %v695, %v693
        %v724 = vpack.c.b16 %v698, %v696
        %v725 = vpack.c.b16 %v699, %v697
        %v726 = vpack.c.b16 %v702, %v700
        %v727 = vpack.c.b16 %v703, %v701
        %v728 = vpack.c.b16 %v706, %v704
        %v729 = vpack.c.b16 %v707, %v705
        %v730 = vpack.c.b16 %v710, %v708
        %v731 = vpack.c.b16 %v711, %v709
        %v732 = vpack.c.b16 %v714, %v712
        %v733 = vpack.c.b16 %v715, %v713
        %v734 = vpack.c.b16 %v718, %v716
        %v735 = vpack.c.b16 %v719, %v717
        %752 = vmatpush.bf16.xpose.msra.mxu0 %v734
        %753 = vmatpush.bf16.xpose.msra.mxu0 %v732
        %754 = vmatpush.bf16.xpose.msra.mxu0 %v730
        %755 = vmatpush.bf16.xpose.msra.mxu0 %v728
        %756 = vmatpush.bf16.xpose.msra.mxu0 %v726
        %757 = vmatpush.bf16.xpose.msra.mxu0 %v724
        %758 = vmatpush.bf16.xpose.msra.mxu0 %v722
        %759 = vmatpush.bf16.xpose.msra.mxu0 %v720
        %760 = vmatmul.bf16.gmra.mxu0 %v544
        %v761 = vpop.f32.mrf.mxu0
        %v762 = vadd.f32 0.0, %v761
        %v763 = vpop.f32.mrf.mxu0
        %v764 = vadd.f32 0.0, %v763
        %765 = vmatmul.bf16.gmra.mxu0 %v546
        %v766 = vpop.f32.mrf.mxu0
        %v767 = vadd.f32 0.0, %v766
        %v768 = vpop.f32.mrf.mxu0
        %v769 = vadd.f32 0.0, %v768
        %770 = vmatmul.bf16.gmra.mxu0 %v548
        %v771 = vpop.f32.mrf.mxu0
        %v772 = vadd.f32 0.0, %v771
        %v773 = vpop.f32.mrf.mxu0
        %v774 = vadd.f32 0.0, %v773
        %775 = vmatmul.bf16.gmra.mxu0 %v550
        %v776 = vpop.f32.mrf.mxu0
        %v777 = vadd.f32 0.0, %v776
        %v778 = vpop.f32.mrf.mxu0
        %v779 = vadd.f32 0.0, %v778
        %780 = vmatmul.bf16.gmra.mxu0 %v552
        %v781 = vpop.f32.mrf.mxu0
        %v782 = vadd.f32 0.0, %v781
        %v783 = vpop.f32.mrf.mxu0
        %v784 = vadd.f32 0.0, %v783
        %785 = vmatmul.bf16.gmra.mxu0 %v554
        %v786 = vpop.f32.mrf.mxu0
        %v787 = vadd.f32 0.0, %v786
        %v788 = vpop.f32.mrf.mxu0
        %v789 = vadd.f32 0.0, %v788
        %790 = vmatmul.bf16.gmra.mxu0 %v556
        %v791 = vpop.f32.mrf.mxu0
        %v792 = vadd.f32 0.0, %v791
        %v793 = vpop.f32.mrf.mxu0
        %v794 = vadd.f32 0.0, %v793
        %795 = vmatmul.bf16.gmra.mxu0 %v558
        %v796 = vpop.f32.mrf.mxu0
        %v797 = vadd.f32 0.0, %v796
        %v798 = vpop.f32.mrf.mxu0
        %v799 = vadd.f32 0.0, %v798
        %800 = vmatmul.bf16.gmra.mxu0 %v560
        %v801 = vpop.f32.mrf.mxu0
        %v802 = vadd.f32 0.0, %v801
        %v803 = vpop.f32.mrf.mxu0
        %v804 = vadd.f32 0.0, %v803
        %805 = vmatmul.bf16.gmra.mxu0 %v562
        %v806 = vpop.f32.mrf.mxu0
        %v807 = vadd.f32 0.0, %v806
        %v808 = vpop.f32.mrf.mxu0
        %v809 = vadd.f32 0.0, %v808
        %810 = vmatmul.bf16.gmra.mxu0 %v564
        %v811 = vpop.f32.mrf.mxu0
        %v812 = vadd.f32 0.0, %v811
        %v813 = vpop.f32.mrf.mxu0
        %v814 = vadd.f32 0.0, %v813
        %815 = vmatmul.bf16.gmra.mxu0 %v566
        %v816 = vpop.f32.mrf.mxu0
        %v817 = vadd.f32 0.0, %v816
        %v818 = vpop.f32.mrf.mxu0
        %v819 = vadd.f32 0.0, %v818
        %820 = vmatmul.bf16.gmra.mxu0 %v568
        %v821 = vpop.f32.mrf.mxu0
        %v822 = vadd.f32 0.0, %v821
        %v823 = vpop.f32.mrf.mxu0
        %v824 = vadd.f32 0.0, %v823
        %825 = vmatmul.bf16.gmra.mxu0 %v570
        %v826 = vpop.f32.mrf.mxu0
        %v827 = vadd.f32 0.0, %v826
        %v828 = vpop.f32.mrf.mxu0
        %v829 = vadd.f32 0.0, %v828
        %830 = vmatmul.bf16.gmra.mxu0 %v572
        %v831 = vpop.f32.mrf.mxu0
        %v832 = vadd.f32 0.0, %v831
        %v833 = vpop.f32.mrf.mxu0
        %v834 = vadd.f32 0.0, %v833
        %835 = vmatmul.bf16.gmra.mxu0 %v574
        %v836 = vpop.f32.mrf.mxu0
        %v837 = vadd.f32 0.0, %v836
        %v838 = vpop.f32.mrf.mxu0
        %v839 = vadd.f32 0.0, %v838
        %840 = vmatmul.bf16.gmra.mxu0 %v576
        %v841 = vpop.f32.mrf.mxu0
        %v842 = vadd.f32 0.0, %v841
        %v843 = vpop.f32.mrf.mxu0
        %v844 = vadd.f32 0.0, %v843
        %845 = vmatmul.bf16.gmra.mxu0 %v578
        %v846 = vpop.f32.mrf.mxu0
        %v847 = vadd.f32 0.0, %v846
        %v848 = vpop.f32.mrf.mxu0
        %v849 = vadd.f32 0.0, %v848
        %850 = vmatmul.bf16.gmra.mxu0 %v580
        %v851 = vpop.f32.mrf.mxu0
        %v852 = vadd.f32 0.0, %v851
        %v853 = vpop.f32.mrf.mxu0
        %v854 = vadd.f32 0.0, %v853
        %855 = vmatmul.bf16.gmra.mxu0 %v582
        %v856 = vpop.f32.mrf.mxu0
        %v857 = vadd.f32 0.0, %v856
        %v858 = vpop.f32.mrf.mxu0
        %v859 = vadd.f32 0.0, %v858
        %860 = vmatmul.bf16.gmra.mxu0 %v584
        %v861 = vpop.f32.mrf.mxu0
        %v862 = vadd.f32 0.0, %v861
        %v863 = vpop.f32.mrf.mxu0
        %v864 = vadd.f32 0.0, %v863
        %865 = vmatmul.bf16.gmra.mxu0 %v586
        %v866 = vpop.f32.mrf.mxu0
        %v867 = vadd.f32 0.0, %v866
        %v868 = vpop.f32.mrf.mxu0
        %v869 = vadd.f32 0.0, %v868
        %870 = vmatmul.bf16.gmra.mxu0 %v588
        %v871 = vpop.f32.mrf.mxu0
        %v872 = vadd.f32 0.0, %v871
        %v873 = vpop.f32.mrf.mxu0
        %v874 = vadd.f32 0.0, %v873
        %875 = vmatmul.bf16.gmra.mxu0 %v590
        %v876 = vpop.f32.mrf.mxu0
        %v877 = vadd.f32 0.0, %v876
        %v878 = vpop.f32.mrf.mxu0
        %v879 = vadd.f32 0.0, %v878
        %880 = vmatmul.bf16.gmra.mxu0 %v592
        %v881 = vpop.f32.mrf.mxu0
        %v882 = vadd.f32 0.0, %v881
        %v883 = vpop.f32.mrf.mxu0
        %v884 = vadd.f32 0.0, %v883
        %885 = vmatmul.bf16.gmra.mxu0 %v594
        %v886 = vpop.f32.mrf.mxu0
        %v887 = vadd.f32 0.0, %v886
        %v888 = vpop.f32.mrf.mxu0
        %v889 = vadd.f32 0.0, %v888
        %890 = vmatmul.bf16.gmra.mxu0 %v596
        %v891 = vpop.f32.mrf.mxu0
        %v892 = vadd.f32 0.0, %v891
        %v893 = vpop.f32.mrf.mxu0
        %v894 = vadd.f32 0.0, %v893
        %895 = vmatmul.bf16.gmra.mxu0 %v598
        %v896 = vpop.f32.mrf.mxu0
        %v897 = vadd.f32 0.0, %v896
        %v898 = vpop.f32.mrf.mxu0
        %v899 = vadd.f32 0.0, %v898
        %900 = vmatmul.bf16.gmra.mxu0 %v600
        %v901 = vpop.f32.mrf.mxu0
        %v902 = vadd.f32 0.0, %v901
        %v903 = vpop.f32.mrf.mxu0
        %v904 = vadd.f32 0.0, %v903
        %905 = vmatmul.bf16.gmra.mxu0 %v602
        %v906 = vpop.f32.mrf.mxu0
        %v907 = vadd.f32 0.0, %v906
        %v908 = vpop.f32.mrf.mxu0
        %v909 = vadd.f32 0.0, %v908
        %910 = vmatmul.bf16.gmra.mxu0 %v604
        %v911 = vpop.f32.mrf.mxu0
        %v912 = vadd.f32 0.0, %v911
        %v913 = vpop.f32.mrf.mxu0
        %v914 = vadd.f32 0.0, %v913
        %915 = vmatmul.bf16.gmra.mxu0 %v606
        %v916 = vpop.f32.mrf.mxu0
        %v917 = vadd.f32 0.0, %v916
        %v918 = vpop.f32.mrf.mxu0
        %v919 = vadd.f32 0.0, %v918
        %920 = vdwg.mxu0
        %921 = vmatpush.bf16.xpose.msra.mxu0 %v735
        %922 = vmatpush.bf16.xpose.msra.mxu0 %v733
        %923 = vmatpush.bf16.xpose.msra.mxu0 %v731
        %924 = vmatpush.bf16.xpose.msra.mxu0 %v729
        %925 = vmatpush.bf16.xpose.msra.mxu0 %v727
        %926 = vmatpush.bf16.xpose.msra.mxu0 %v725
        %927 = vmatpush.bf16.xpose.msra.mxu0 %v723
        %928 = vmatpush.bf16.xpose.msra.mxu0 %v721
        %929 = vmatmul.bf16.gmra.mxu0 %v545
        %v930 = vpop.f32.mrf.mxu0
        %v931 = vadd.f32 %v762, %v930
        %v932 = vpop.f32.mrf.mxu0
        %v933 = vadd.f32 %v764, %v932
        %934 = vmatmul.bf16.gmra.mxu0 %v547
        %v935 = vpop.f32.mrf.mxu0
        %v936 = vadd.f32 %v767, %v935
        %v937 = vpop.f32.mrf.mxu0
        %v938 = vadd.f32 %v769, %v937
        %939 = vmatmul.bf16.gmra.mxu0 %v549
        %v940 = vpop.f32.mrf.mxu0
        %v941 = vadd.f32 %v772, %v940
        %v942 = vpop.f32.mrf.mxu0
        %v943 = vadd.f32 %v774, %v942
        %944 = vmatmul.bf16.gmra.mxu0 %v551
        %v945 = vpop.f32.mrf.mxu0
        %v946 = vadd.f32 %v777, %v945
        %v947 = vpop.f32.mrf.mxu0
        %v948 = vadd.f32 %v779, %v947
        %949 = vmatmul.bf16.gmra.mxu0 %v553
        %v950 = vpop.f32.mrf.mxu0
        %v951 = vadd.f32 %v782, %v950
        %v952 = vpop.f32.mrf.mxu0
        %v953 = vadd.f32 %v784, %v952
        %954 = vmatmul.bf16.gmra.mxu0 %v555
        %v955 = vpop.f32.mrf.mxu0
        %v956 = vadd.f32 %v787, %v955
        %v957 = vpop.f32.mrf.mxu0
        %v958 = vadd.f32 %v789, %v957
        %959 = vmatmul.bf16.gmra.mxu0 %v557
        %v960 = vpop.f32.mrf.mxu0
        %v961 = vadd.f32 %v792, %v960
        %v962 = vpop.f32.mrf.mxu0
        %v963 = vadd.f32 %v794, %v962
        %964 = vmatmul.bf16.gmra.mxu0 %v559
        %v965 = vpop.f32.mrf.mxu0
        %v966 = vadd.f32 %v797, %v965
        %v967 = vpop.f32.mrf.mxu0
        %v968 = vadd.f32 %v799, %v967
        %969 = vmatmul.bf16.gmra.mxu0 %v561
        %v970 = vpop.f32.mrf.mxu0
        %v971 = vadd.f32 %v802, %v970
        %v972 = vpop.f32.mrf.mxu0
        %v973 = vadd.f32 %v804, %v972
        %974 = vmatmul.bf16.gmra.mxu0 %v563
        %v975 = vpop.f32.mrf.mxu0
        %v976 = vadd.f32 %v807, %v975
        %v977 = vpop.f32.mrf.mxu0
        %v978 = vadd.f32 %v809, %v977
        %979 = vmatmul.bf16.gmra.mxu0 %v565
        %v980 = vpop.f32.mrf.mxu0
        %v981 = vadd.f32 %v812, %v980
        %v982 = vpop.f32.mrf.mxu0
        %v983 = vadd.f32 %v814, %v982
        %984 = vmatmul.bf16.gmra.mxu0 %v567
        %v985 = vpop.f32.mrf.mxu0
        %v986 = vadd.f32 %v817, %v985
        %v987 = vpop.f32.mrf.mxu0
        %v988 = vadd.f32 %v819, %v987
        %989 = vmatmul.bf16.gmra.mxu0 %v569
        %v990 = vpop.f32.mrf.mxu0
        %v991 = vadd.f32 %v822, %v990
        %v992 = vpop.f32.mrf.mxu0
        %v993 = vadd.f32 %v824, %v992
        %994 = vmatmul.bf16.gmra.mxu0 %v571
        %v995 = vpop.f32.mrf.mxu0
        %v996 = vadd.f32 %v827, %v995
        %v997 = vpop.f32.mrf.mxu0
        %v998 = vadd.f32 %v829, %v997
        %999 = vmatmul.bf16.gmra.mxu0 %v573
        %v1000 = vpop.f32.mrf.mxu0
        %v1001 = vadd.f32 %v832, %v1000
        %v1002 = vpop.f32.mrf.mxu0
        %v1003 = vadd.f32 %v834, %v1002
        %1004 = vmatmul.bf16.gmra.mxu0 %v575
        %v1005 = vpop.f32.mrf.mxu0
        %v1006 = vadd.f32 %v837, %v1005
        %v1007 = vpop.f32.mrf.mxu0
        %v1008 = vadd.f32 %v839, %v1007
        %1009 = vmatmul.bf16.gmra.mxu0 %v577
        %v1010 = vpop.f32.mrf.mxu0
        %v1011 = vadd.f32 %v842, %v1010
        %v1012 = vpop.f32.mrf.mxu0
        %v1013 = vadd.f32 %v844, %v1012
        %1014 = vmatmul.bf16.gmra.mxu0 %v579
        %v1015 = vpop.f32.mrf.mxu0
        %v1016 = vadd.f32 %v847, %v1015
        %v1017 = vpop.f32.mrf.mxu0
        %v1018 = vadd.f32 %v849, %v1017
        %1019 = vmatmul.bf16.gmra.mxu0 %v581
        %v1020 = vpop.f32.mrf.mxu0
        %v1021 = vadd.f32 %v852, %v1020
        %v1022 = vpop.f32.mrf.mxu0
        %v1023 = vadd.f32 %v854, %v1022
        %1024 = vmatmul.bf16.gmra.mxu0 %v583
        %v1025 = vpop.f32.mrf.mxu0
        %v1026 = vadd.f32 %v857, %v1025
        %v1027 = vpop.f32.mrf.mxu0
        %v1028 = vadd.f32 %v859, %v1027
        %1029 = vmatmul.bf16.gmra.mxu0 %v585
        %v1030 = vpop.f32.mrf.mxu0
        %v1031 = vadd.f32 %v862, %v1030
        %v1032 = vpop.f32.mrf.mxu0
        %v1033 = vadd.f32 %v864, %v1032
        %1034 = vmatmul.bf16.gmra.mxu0 %v587
        %v1035 = vpop.f32.mrf.mxu0
        %v1036 = vadd.f32 %v867, %v1035
        %v1037 = vpop.f32.mrf.mxu0
        %v1038 = vadd.f32 %v869, %v1037
        %1039 = vmatmul.bf16.gmra.mxu0 %v589
        %v1040 = vpop.f32.mrf.mxu0
        %v1041 = vadd.f32 %v872, %v1040
        %v1042 = vpop.f32.mrf.mxu0
        %v1043 = vadd.f32 %v874, %v1042
        %1044 = vmatmul.bf16.gmra.mxu0 %v591
        %v1045 = vpop.f32.mrf.mxu0
        %v1046 = vadd.f32 %v877, %v1045
        %v1047 = vpop.f32.mrf.mxu0
        %v1048 = vadd.f32 %v879, %v1047
        %1049 = vmatmul.bf16.gmra.mxu0 %v593
        %v1050 = vpop.f32.mrf.mxu0
        %v1051 = vadd.f32 %v882, %v1050
        %v1052 = vpop.f32.mrf.mxu0
        %v1053 = vadd.f32 %v884, %v1052
        %1054 = vmatmul.bf16.gmra.mxu0 %v595
        %v1055 = vpop.f32.mrf.mxu0
        %v1056 = vadd.f32 %v887, %v1055
        %v1057 = vpop.f32.mrf.mxu0
        %v1058 = vadd.f32 %v889, %v1057
        %1059 = vmatmul.bf16.gmra.mxu0 %v597
        %v1060 = vpop.f32.mrf.mxu0
        %v1061 = vadd.f32 %v892, %v1060
        %v1062 = vpop.f32.mrf.mxu0
        %v1063 = vadd.f32 %v894, %v1062
        %1064 = vmatmul.bf16.gmra.mxu0 %v599
        %v1065 = vpop.f32.mrf.mxu0
        %v1066 = vadd.f32 %v897, %v1065
        %v1067 = vpop.f32.mrf.mxu0
        %v1068 = vadd.f32 %v899, %v1067
        %1069 = vmatmul.bf16.gmra.mxu0 %v601
        %v1070 = vpop.f32.mrf.mxu0
        %v1071 = vadd.f32 %v902, %v1070
        %v1072 = vpop.f32.mrf.mxu0
        %v1073 = vadd.f32 %v904, %v1072
        %1074 = vmatmul.bf16.gmra.mxu0 %v603
        %v1075 = vpop.f32.mrf.mxu0
        %v1076 = vadd.f32 %v907, %v1075
        %v1077 = vpop.f32.mrf.mxu0
        %v1078 = vadd.f32 %v909, %v1077
        %1079 = vmatmul.bf16.gmra.mxu0 %v605
        %v1080 = vpop.f32.mrf.mxu0
        %v1081 = vadd.f32 %v912, %v1080
        %v1082 = vpop.f32.mrf.mxu0
        %v1083 = vadd.f32 %v914, %v1082
        %1084 = vmatmul.bf16.gmra.mxu0 %v607
        %v1085 = vpop.f32.mrf.mxu0
        %v1086 = vadd.f32 %v917, %v1085
        %v1087 = vpop.f32.mrf.mxu0
        %v1088 = vadd.f32 %v919, %v1087
        %1089 = vdwg.mxu0
        %v1090 = vmul.f32 %v931, 0.01
        %v1091 = vmul.f32 %v933, 0.01
        %v1092 = vmul.f32 %v936, 0.01
        %v1093 = vmul.f32 %v938, 0.01
        %v1094 = vmul.f32 %v941, 0.01
        %v1095 = vmul.f32 %v943, 0.01
        %v1096 = vmul.f32 %v946, 0.01
        %v1097 = vmul.f32 %v948, 0.01
        %v1098 = vmul.f32 %v951, 0.01
        %v1099 = vmul.f32 %v953, 0.01
        %v1100 = vmul.f32 %v956, 0.01
        %v1101 = vmul.f32 %v958, 0.01
        %v1102 = vmul.f32 %v961, 0.01
        %v1103 = vmul.f32 %v963, 0.01
        %v1104 = vmul.f32 %v966, 0.01
        %v1105 = vmul.f32 %v968, 0.01
        %v1106 = vmul.f32 %v971, 0.01
        %v1107 = vmul.f32 %v973, 0.01
        %v1108 = vmul.f32 %v976, 0.01
        %v1109 = vmul.f32 %v978, 0.01
        %v1110 = vmul.f32 %v981, 0.01
        %v1111 = vmul.f32 %v983, 0.01
        %v1112 = vmul.f32 %v986, 0.01
        %v1113 = vmul.f32 %v988, 0.01
        %v1114 = vmul.f32 %v991, 0.01
        %v1115 = vmul.f32 %v993, 0.01
        %v1116 = vmul.f32 %v996, 0.01
        %v1117 = vmul.f32 %v998, 0.01
        %v1118 = vmul.f32 %v1001, 0.01
        %v1119 = vmul.f32 %v1003, 0.01
        %v1120 = vmul.f32 %v1006, 0.01
        %v1121 = vmul.f32 %v1008, 0.01
        %v1122 = vmul.f32 %v1011, 0.01
        %v1123 = vmul.f32 %v1013, 0.01
        %v1124 = vmul.f32 %v1016, 0.01
        %v1125 = vmul.f32 %v1018, 0.01
        %v1126 = vmul.f32 %v1021, 0.01
        %v1127 = vmul.f32 %v1023, 0.01
        %v1128 = vmul.f32 %v1026, 0.01
        %v1129 = vmul.f32 %v1028, 0.01
        %v1130 = vmul.f32 %v1031, 0.01
        %v1131 = vmul.f32 %v1033, 0.01
        %v1132 = vmul.f32 %v1036, 0.01
        %v1133 = vmul.f32 %v1038, 0.01
        %v1134 = vmul.f32 %v1041, 0.01
        %v1135 = vmul.f32 %v1043, 0.01
        %v1136 = vmul.f32 %v1046, 0.01
        %v1137 = vmul.f32 %v1048, 0.01
        %v1138 = vmul.f32 %v1051, 0.01
        %v1139 = vmul.f32 %v1053, 0.01
        %v1140 = vmul.f32 %v1056, 0.01
        %v1141 = vmul.f32 %v1058, 0.01
        %v1142 = vmul.f32 %v1061, 0.01
        %v1143 = vmul.f32 %v1063, 0.01
        %v1144 = vmul.f32 %v1066, 0.01
        %v1145 = vmul.f32 %v1068, 0.01
        %v1146 = vmul.f32 %v1071, 0.01
        %v1147 = vmul.f32 %v1073, 0.01
        %v1148 = vmul.f32 %v1076, 0.01
        %v1149 = vmul.f32 %v1078, 0.01
        %v1150 = vmul.f32 %v1081, 0.01
        %v1151 = vmul.f32 %v1083, 0.01
        %v1152 = vmul.f32 %v1086, 0.01
        %v1153 = vmul.f32 %v1088, 0.01
        %v1154 = vmax.f32 %v931, %v1090
        %v1155 = vmax.f32 %v933, %v1091
        %v1156 = vmax.f32 %v936, %v1092
        %v1157 = vmax.f32 %v938, %v1093
        %v1158 = vmax.f32 %v941, %v1094
        %v1159 = vmax.f32 %v943, %v1095
        %v1160 = vmax.f32 %v946, %v1096
        %v1161 = vmax.f32 %v948, %v1097
        %v1162 = vmax.f32 %v951, %v1098
        %v1163 = vmax.f32 %v953, %v1099
        %v1164 = vmax.f32 %v956, %v1100
        %v1165 = vmax.f32 %v958, %v1101
        %v1166 = vmax.f32 %v961, %v1102
        %v1167 = vmax.f32 %v963, %v1103
        %v1168 = vmax.f32 %v966, %v1104
        %v1169 = vmax.f32 %v968, %v1105
        %v1170 = vmax.f32 %v971, %v1106
        %v1171 = vmax.f32 %v973, %v1107
        %v1172 = vmax.f32 %v976, %v1108
        %v1173 = vmax.f32 %v978, %v1109
        %v1174 = vmax.f32 %v981, %v1110
        %v1175 = vmax.f32 %v983, %v1111
        %v1176 = vmax.f32 %v986, %v1112
        %v1177 = vmax.f32 %v988, %v1113
        %v1178 = vmax.f32 %v991, %v1114
        %v1179 = vmax.f32 %v993, %v1115
        %v1180 = vmax.f32 %v996, %v1116
        %v1181 = vmax.f32 %v998, %v1117
        %v1182 = vmax.f32 %v1001, %v1118
        %v1183 = vmax.f32 %v1003, %v1119
        %v1184 = vmax.f32 %v1006, %v1120
        %v1185 = vmax.f32 %v1008, %v1121
        %v1186 = vmax.f32 %v1011, %v1122
        %v1187 = vmax.f32 %v1013, %v1123
        %v1188 = vmax.f32 %v1016, %v1124
        %v1189 = vmax.f32 %v1018, %v1125
        %v1190 = vmax.f32 %v1021, %v1126
        %v1191 = vmax.f32 %v1023, %v1127
        %v1192 = vmax.f32 %v1026, %v1128
        %v1193 = vmax.f32 %v1028, %v1129
        %v1194 = vmax.f32 %v1031, %v1130
        %v1195 = vmax.f32 %v1033, %v1131
        %v1196 = vmax.f32 %v1036, %v1132
        %v1197 = vmax.f32 %v1038, %v1133
        %v1198 = vmax.f32 %v1041, %v1134
        %v1199 = vmax.f32 %v1043, %v1135
        %v1200 = vmax.f32 %v1046, %v1136
        %v1201 = vmax.f32 %v1048, %v1137
        %v1202 = vmax.f32 %v1051, %v1138
        %v1203 = vmax.f32 %v1053, %v1139
        %v1204 = vmax.f32 %v1056, %v1140
        %v1205 = vmax.f32 %v1058, %v1141
        %v1206 = vmax.f32 %v1061, %v1142
        %v1207 = vmax.f32 %v1063, %v1143
        %v1208 = vmax.f32 %v1066, %v1144
        %v1209 = vmax.f32 %v1068, %v1145
        %v1210 = vmax.f32 %v1071, %v1146
        %v1211 = vmax.f32 %v1073, %v1147
        %v1212 = vmax.f32 %v1076, %v1148
        %v1213 = vmax.f32 %v1078, %v1149
        %v1214 = vmax.f32 %v1081, %v1150
        %v1215 = vmax.f32 %v1083, %v1151
        %v1216 = vmax.f32 %v1086, %v1152
        %v1217 = vmax.f32 %v1088, %v1153
        %v1218 = vld [vmem:[#allocation3] sm:$0xff]
        %v1219 = vld [vmem:[#allocation3 + $0x8] sm:$0xff]
        %v1220 = vld [vmem:[#allocation3 + $0x10] sm:$0xff]
        %v1221 = vld [vmem:[#allocation3 + $0x18] sm:$0xff]
        %v1222 = vld [vmem:[#allocation3 + $0x20] sm:$0xff]
        %v1223 = vld [vmem:[#allocation3 + $0x28] sm:$0xff]
        %v1224 = vld [vmem:[#allocation3 + $0x30] sm:$0xff]
        %v1225 = vld [vmem:[#allocation3 + $0x38] sm:$0xff]
        %v1226 = vld [vmem:[#allocation3 + $0x40] sm:$0xff]
        %v1227 = vld [vmem:[#allocation3 + $0x48] sm:$0xff]
        %v1228 = vld [vmem:[#allocation3 + $0x50] sm:$0xff]
        %v1229 = vld [vmem:[#allocation3 + $0x58] sm:$0xff]
        %v1230 = vld [vmem:[#allocation3 + $0x60] sm:$0xff]
        %v1231 = vld [vmem:[#allocation3 + $0x68] sm:$0xff]
        %v1232 = vld [vmem:[#allocation3 + $0x70] sm:$0xff]
        %v1233 = vld [vmem:[#allocation3 + $0x78] sm:$0xff]
        %v1234 = vld [vmem:[#allocation3 + $0x80] sm:$0xff]
        %v1235 = vld [vmem:[#allocation3 + $0x88] sm:$0xff]
        %v1236 = vld [vmem:[#allocation3 + $0x90] sm:$0xff]
        %v1237 = vld [vmem:[#allocation3 + $0x98] sm:$0xff]
        %v1238 = vld [vmem:[#allocation3 + $0xa0] sm:$0xff]
        %v1239 = vld [vmem:[#allocation3 + $0xa8] sm:$0xff]
        %v1240 = vld [vmem:[#allocation3 + $0xb0] sm:$0xff]
        %v1241 = vld [vmem:[#allocation3 + $0xb8] sm:$0xff]
        %v1242 = vld [vmem:[#allocation3 + $0xc0] sm:$0xff]
        %v1243 = vld [vmem:[#allocation3 + $0xc8] sm:$0xff]
        %v1244 = vld [vmem:[#allocation3 + $0xd0] sm:$0xff]
        %v1245 = vld [vmem:[#allocation3 + $0xd8] sm:$0xff]
        %v1246 = vld [vmem:[#allocation3 + $0xe0] sm:$0xff]
        %v1247 = vld [vmem:[#allocation3 + $0xe8] sm:$0xff]
        %v1248 = vld [vmem:[#allocation3 + $0xf0] sm:$0xff]
        %v1249 = vld [vmem:[#allocation3 + $0xf8] sm:$0xff]
        %v1250 = vld [vmem:[#allocation3 + $0x100] sm:$0xff]
        %v1251 = vld [vmem:[#allocation3 + $0x108] sm:$0xff]
        %v1252 = vld [vmem:[#allocation3 + $0x110] sm:$0xff]
        %v1253 = vld [vmem:[#allocation3 + $0x118] sm:$0xff]
        %v1254 = vld [vmem:[#allocation3 + $0x120] sm:$0xff]
        %v1255 = vld [vmem:[#allocation3 + $0x128] sm:$0xff]
        %v1256 = vld [vmem:[#allocation3 + $0x130] sm:$0xff]
        %v1257 = vld [vmem:[#allocation3 + $0x138] sm:$0xff]
        %v1258 = vld [vmem:[#allocation3 + $0x140] sm:$0xff]
        %v1259 = vld [vmem:[#allocation3 + $0x148] sm:$0xff]
        %v1260 = vld [vmem:[#allocation3 + $0x150] sm:$0xff]
        %v1261 = vld [vmem:[#allocation3 + $0x158] sm:$0xff]
        %v1262 = vld [vmem:[#allocation3 + $0x160] sm:$0xff]
        %v1263 = vld [vmem:[#allocation3 + $0x168] sm:$0xff]
        %v1264 = vld [vmem:[#allocation3 + $0x170] sm:$0xff]
        %v1265 = vld [vmem:[#allocation3 + $0x178] sm:$0xff]
        %v1266 = vld [vmem:[#allocation3 + $0x180] sm:$0xff]
        %v1267 = vld [vmem:[#allocation3 + $0x188] sm:$0xff]
        %v1268 = vld [vmem:[#allocation3 + $0x190] sm:$0xff]
        %v1269 = vld [vmem:[#allocation3 + $0x198] sm:$0xff]
        %v1270 = vld [vmem:[#allocation3 + $0x1a0] sm:$0xff]
        %v1271 = vld [vmem:[#allocation3 + $0x1a8] sm:$0xff]
        %v1272 = vld [vmem:[#allocation3 + $0x1b0] sm:$0xff]
        %v1273 = vld [vmem:[#allocation3 + $0x1b8] sm:$0xff]
        %v1274 = vld [vmem:[#allocation3 + $0x1c0] sm:$0xff]
        %v1275 = vld [vmem:[#allocation3 + $0x1c8] sm:$0xff]
        %v1276 = vld [vmem:[#allocation3 + $0x1d0] sm:$0xff]
        %v1277 = vld [vmem:[#allocation3 + $0x1d8] sm:$0xff]
        %v1278 = vld [vmem:[#allocation3 + $0x1e0] sm:$0xff]
        %v1279 = vld [vmem:[#allocation3 + $0x1e8] sm:$0xff]
        %v1280 = vld [vmem:[#allocation3 + $0x1f0] sm:$0xff]
        %v1281 = vld [vmem:[#allocation3 + $0x1f8] sm:$0xff]
        %v1282 = vpack.c.bf16 %v1155, %v1154
        %v1283 = vpack.c.bf16 %v1157, %v1156
        %v1284 = vpack.c.bf16 %v1159, %v1158
        %v1285 = vpack.c.bf16 %v1161, %v1160
        %v1286 = vpack.c.bf16 %v1163, %v1162
        %v1287 = vpack.c.bf16 %v1165, %v1164
        %v1288 = vpack.c.bf16 %v1167, %v1166
        %v1289 = vpack.c.bf16 %v1169, %v1168
        %v1290 = vpack.c.bf16 %v1171, %v1170
        %v1291 = vpack.c.bf16 %v1173, %v1172
        %v1292 = vpack.c.bf16 %v1175, %v1174
        %v1293 = vpack.c.bf16 %v1177, %v1176
        %v1294 = vpack.c.bf16 %v1179, %v1178
        %v1295 = vpack.c.bf16 %v1181, %v1180
        %v1296 = vpack.c.bf16 %v1183, %v1182
        %v1297 = vpack.c.bf16 %v1185, %v1184
        %v1298 = vpack.c.bf16 %v1187, %v1186
        %v1299 = vpack.c.bf16 %v1189, %v1188
        %v1300 = vpack.c.bf16 %v1191, %v1190
        %v1301 = vpack.c.bf16 %v1193, %v1192
        %v1302 = vpack.c.bf16 %v1195, %v1194
        %v1303 = vpack.c.bf16 %v1197, %v1196
        %v1304 = vpack.c.bf16 %v1199, %v1198
        %v1305 = vpack.c.bf16 %v1201, %v1200
        %v1306 = vpack.c.bf16 %v1203, %v1202
        %v1307 = vpack.c.bf16 %v1205, %v1204
        %v1308 = vpack.c.bf16 %v1207, %v1206
        %v1309 = vpack.c.bf16 %v1209, %v1208
        %v1310 = vpack.c.bf16 %v1211, %v1210
        %v1311 = vpack.c.bf16 %v1213, %v1212
        %v1312 = vpack.c.bf16 %v1215, %v1214
        %v1313 = vpack.c.bf16 %v1217, %v1216
        %v1314 = vld [vmem:[%s3] sm:$0xff]
        %v1315 = vld [vmem:[%s3 + $0x8] sm:$0xff]
        %v1316 = vld [vmem:[%s3 + $0x10] sm:$0xff]
        %v1317 = vld [vmem:[%s3 + $0x18] sm:$0xff]
        %v1318 = vld [vmem:[%s3 + $0x20] sm:$0xff]
        %v1319 = vld [vmem:[%s3 + $0x28] sm:$0xff]
        %v1320 = vld [vmem:[%s3 + $0x30] sm:$0xff]
        %v1321 = vld [vmem:[%s3 + $0x38] sm:$0xff]
        %v1322 = vld [vmem:[%s3 + $0x40] sm:$0xff]
        %v1323 = vld [vmem:[%s3 + $0x48] sm:$0xff]
        %v1324 = vld [vmem:[%s3 + $0x50] sm:$0xff]
        %v1325 = vld [vmem:[%s3 + $0x58] sm:$0xff]
        %v1326 = vld [vmem:[%s3 + $0x60] sm:$0xff]
        %v1327 = vld [vmem:[%s3 + $0x68] sm:$0xff]
        %v1328 = vld [vmem:[%s3 + $0x70] sm:$0xff]
        %v1329 = vld [vmem:[%s3 + $0x78] sm:$0xff]
        %v1330 = vld [vmem:[%s3 + $0x80] sm:$0xff]
        %v1331 = vld [vmem:[%s3 + $0x88] sm:$0xff]
        %v1332 = vld [vmem:[%s3 + $0x90] sm:$0xff]
        %v1333 = vld [vmem:[%s3 + $0x98] sm:$0xff]
        %v1334 = vld [vmem:[%s3 + $0xa0] sm:$0xff]
        %v1335 = vld [vmem:[%s3 + $0xa8] sm:$0xff]
        %v1336 = vld [vmem:[%s3 + $0xb0] sm:$0xff]
        %v1337 = vld [vmem:[%s3 + $0xb8] sm:$0xff]
        %v1338 = vld [vmem:[%s3 + $0xc0] sm:$0xff]
        %v1339 = vld [vmem:[%s3 + $0xc8] sm:$0xff]
        %v1340 = vld [vmem:[%s3 + $0xd0] sm:$0xff]
        %v1341 = vld [vmem:[%s3 + $0xd8] sm:$0xff]
        %v1342 = vld [vmem:[%s3 + $0xe0] sm:$0xff]
        %v1343 = vld [vmem:[%s3 + $0xe8] sm:$0xff]
        %v1344 = vld [vmem:[%s3 + $0xf0] sm:$0xff]
        %v1345 = vld [vmem:[%s3 + $0xf8] sm:$0xff]
        %1347 = vset.pattern.permute.xlu0 0
        %1348 = vperm.xlu0 %1347, %v1314
        %v1349 = vpop.permute.xlu0 %1348
        %1352 = vset.pattern.permute.xlu0 0
        %1353 = vperm.xlu0 %1352, %v1315
        %v1354 = vpop.permute.xlu0 %1353
        %1357 = vset.pattern.permute.xlu0 0
        %1358 = vperm.xlu0 %1357, %v1316
        %v1359 = vpop.permute.xlu0 %1358
        %1362 = vset.pattern.permute.xlu0 0
        %1363 = vperm.xlu0 %1362, %v1317
        %v1364 = vpop.permute.xlu0 %1363
        %1367 = vset.pattern.permute.xlu0 0
        %1368 = vperm.xlu0 %1367, %v1318
        %v1369 = vpop.permute.xlu0 %1368
        %1372 = vset.pattern.permute.xlu0 0
        %1373 = vperm.xlu0 %1372, %v1319
        %v1374 = vpop.permute.xlu0 %1373
        %1377 = vset.pattern.permute.xlu0 0
        %1378 = vperm.xlu0 %1377, %v1320
        %v1379 = vpop.permute.xlu0 %1378
        %1382 = vset.pattern.permute.xlu0 0
        %1383 = vperm.xlu0 %1382, %v1321
        %v1384 = vpop.permute.xlu0 %1383
        %1387 = vset.pattern.permute.xlu0 0
        %1388 = vperm.xlu0 %1387, %v1322
        %v1389 = vpop.permute.xlu0 %1388
        %1392 = vset.pattern.permute.xlu0 0
        %1393 = vperm.xlu0 %1392, %v1323
        %v1394 = vpop.permute.xlu0 %1393
        %1397 = vset.pattern.permute.xlu0 0
        %1398 = vperm.xlu0 %1397, %v1324
        %v1399 = vpop.permute.xlu0 %1398
        %1402 = vset.pattern.permute.xlu0 0
        %1403 = vperm.xlu0 %1402, %v1325
        %v1404 = vpop.permute.xlu0 %1403
        %1407 = vset.pattern.permute.xlu0 0
        %1408 = vperm.xlu0 %1407, %v1326
        %v1409 = vpop.permute.xlu0 %1408
        %1412 = vset.pattern.permute.xlu0 0
        %1413 = vperm.xlu0 %1412, %v1327
        %v1414 = vpop.permute.xlu0 %1413
        %1417 = vset.pattern.permute.xlu0 0
        %1418 = vperm.xlu0 %1417, %v1328
        %v1419 = vpop.permute.xlu0 %1418
        %1422 = vset.pattern.permute.xlu0 0
        %1423 = vperm.xlu0 %1422, %v1329
        %v1424 = vpop.permute.xlu0 %1423
        %1427 = vset.pattern.permute.xlu0 0
        %1428 = vperm.xlu0 %1427, %v1330
        %v1429 = vpop.permute.xlu0 %1428
        %1432 = vset.pattern.permute.xlu0 0
        %1433 = vperm.xlu0 %1432, %v1331
        %v1434 = vpop.permute.xlu0 %1433
        %1437 = vset.pattern.permute.xlu0 0
        %1438 = vperm.xlu0 %1437, %v1332
        %v1439 = vpop.permute.xlu0 %1438
        %1442 = vset.pattern.permute.xlu0 0
        %1443 = vperm.xlu0 %1442, %v1333
        %v1444 = vpop.permute.xlu0 %1443
        %1447 = vset.pattern.permute.xlu0 0
        %1448 = vperm.xlu0 %1447, %v1334
        %v1449 = vpop.permute.xlu0 %1448
        %1452 = vset.pattern.permute.xlu0 0
        %1453 = vperm.xlu0 %1452, %v1335
        %v1454 = vpop.permute.xlu0 %1453
        %1457 = vset.pattern.permute.xlu0 0
        %1458 = vperm.xlu0 %1457, %v1336
        %v1459 = vpop.permute.xlu0 %1458
        %1462 = vset.pattern.permute.xlu0 0
        %1463 = vperm.xlu0 %1462, %v1337
        %v1464 = vpop.permute.xlu0 %1463
        %1467 = vset.pattern.permute.xlu0 0
        %1468 = vperm.xlu0 %1467, %v1338
        %v1469 = vpop.permute.xlu0 %1468
        %1472 = vset.pattern.permute.xlu0 0
        %1473 = vperm.xlu0 %1472, %v1339
        %v1474 = vpop.permute.xlu0 %1473
        %1477 = vset.pattern.permute.xlu0 0
        %1478 = vperm.xlu0 %1477, %v1340
        %v1479 = vpop.permute.xlu0 %1478
        %1482 = vset.pattern.permute.xlu0 0
        %1483 = vperm.xlu0 %1482, %v1341
        %v1484 = vpop.permute.xlu0 %1483
        %1487 = vset.pattern.permute.xlu0 0
        %1488 = vperm.xlu0 %1487, %v1342
        %v1489 = vpop.permute.xlu0 %1488
        %1492 = vset.pattern.permute.xlu0 0
        %1493 = vperm.xlu0 %1492, %v1343
        %v1494 = vpop.permute.xlu0 %1493
        %1497 = vset.pattern.permute.xlu0 0
        %1498 = vperm.xlu0 %1497, %v1344
        %v1499 = vpop.permute.xlu0 %1498
        %1502 = vset.pattern.permute.xlu0 0
        %1503 = vperm.xlu0 %1502, %v1345
        %v1504 = vpop.permute.xlu0 %1503
        %v1570 = vunpack.c.l.b16 %v1218
        %v1571 = vunpack.c.h.b16 %v1218
        %v1572 = vunpack.c.l.b16 %v1219
        %v1573 = vunpack.c.h.b16 %v1219
        %v1574 = vunpack.c.l.b16 %v1220
        %v1575 = vunpack.c.h.b16 %v1220
        %v1576 = vunpack.c.l.b16 %v1221
        %v1577 = vunpack.c.h.b16 %v1221
        %v1578 = vunpack.c.l.b16 %v1222
        %v1579 = vunpack.c.h.b16 %v1222
        %v1580 = vunpack.c.l.b16 %v1223
        %v1581 = vunpack.c.h.b16 %v1223
        %v1582 = vunpack.c.l.b16 %v1224
        %v1583 = vunpack.c.h.b16 %v1224
        %v1584 = vunpack.c.l.b16 %v1225
        %v1585 = vunpack.c.h.b16 %v1225
        %v1586 = vunpack.c.l.b16 %v1226
        %v1587 = vunpack.c.h.b16 %v1226
        %v1588 = vunpack.c.l.b16 %v1227
        %v1589 = vunpack.c.h.b16 %v1227
        %v1590 = vunpack.c.l.b16 %v1228
        %v1591 = vunpack.c.h.b16 %v1228
        %v1592 = vunpack.c.l.b16 %v1229
        %v1593 = vunpack.c.h.b16 %v1229
        %v1594 = vunpack.c.l.b16 %v1230
        %v1595 = vunpack.c.h.b16 %v1230
        %v1596 = vunpack.c.l.b16 %v1231
        %v1597 = vunpack.c.h.b16 %v1231
        %v1598 = vunpack.c.l.b16 %v1232
        %v1599 = vunpack.c.h.b16 %v1232
        %v1600 = vunpack.c.l.b16 %v1233
        %v1601 = vunpack.c.h.b16 %v1233
        %v1602 = vunpack.c.l.b16 %v1234
        %v1603 = vunpack.c.h.b16 %v1234
        %v1604 = vunpack.c.l.b16 %v1235
        %v1605 = vunpack.c.h.b16 %v1235
        %v1606 = vunpack.c.l.b16 %v1236
        %v1607 = vunpack.c.h.b16 %v1236
        %v1608 = vunpack.c.l.b16 %v1237
        %v1609 = vunpack.c.h.b16 %v1237
        %v1610 = vunpack.c.l.b16 %v1238
        %v1611 = vunpack.c.h.b16 %v1238
        %v1612 = vunpack.c.l.b16 %v1239
        %v1613 = vunpack.c.h.b16 %v1239
        %v1614 = vunpack.c.l.b16 %v1240
        %v1615 = vunpack.c.h.b16 %v1240
        %v1616 = vunpack.c.l.b16 %v1241
        %v1617 = vunpack.c.h.b16 %v1241
        %v1618 = vunpack.c.l.b16 %v1242
        %v1619 = vunpack.c.h.b16 %v1242
        %v1620 = vunpack.c.l.b16 %v1243
        %v1621 = vunpack.c.h.b16 %v1243
        %v1622 = vunpack.c.l.b16 %v1244
        %v1623 = vunpack.c.h.b16 %v1244
        %v1624 = vunpack.c.l.b16 %v1245
        %v1625 = vunpack.c.h.b16 %v1245
        %v1626 = vunpack.c.l.b16 %v1246
        %v1627 = vunpack.c.h.b16 %v1246
        %v1628 = vunpack.c.l.b16 %v1247
        %v1629 = vunpack.c.h.b16 %v1247
        %v1630 = vunpack.c.l.b16 %v1248
        %v1631 = vunpack.c.h.b16 %v1248
        %v1632 = vunpack.c.l.b16 %v1249
        %v1633 = vunpack.c.h.b16 %v1249
        %v1634 = vunpack.c.l.b16 %v1250
        %v1635 = vunpack.c.h.b16 %v1250
        %v1636 = vunpack.c.l.b16 %v1251
        %v1637 = vunpack.c.h.b16 %v1251
        %v1638 = vunpack.c.l.b16 %v1252
        %v1639 = vunpack.c.h.b16 %v1252
        %v1640 = vunpack.c.l.b16 %v1253
        %v1641 = vunpack.c.h.b16 %v1253
        %v1642 = vunpack.c.l.b16 %v1254
        %v1643 = vunpack.c.h.b16 %v1254
        %v1644 = vunpack.c.l.b16 %v1255
        %v1645 = vunpack.c.h.b16 %v1255
        %v1646 = vunpack.c.l.b16 %v1256
        %v1647 = vunpack.c.h.b16 %v1256
        %v1648 = vunpack.c.l.b16 %v1257
        %v1649 = vunpack.c.h.b16 %v1257
        %v1650 = vunpack.c.l.b16 %v1258
        %v1651 = vunpack.c.h.b16 %v1258
        %v1652 = vunpack.c.l.b16 %v1259
        %v1653 = vunpack.c.h.b16 %v1259
        %v1654 = vunpack.c.l.b16 %v1260
        %v1655 = vunpack.c.h.b16 %v1260
        %v1656 = vunpack.c.l.b16 %v1261
        %v1657 = vunpack.c.h.b16 %v1261
        %v1658 = vunpack.c.l.b16 %v1262
        %v1659 = vunpack.c.h.b16 %v1262
        %v1660 = vunpack.c.l.b16 %v1263
        %v1661 = vunpack.c.h.b16 %v1263
        %v1662 = vunpack.c.l.b16 %v1264
        %v1663 = vunpack.c.h.b16 %v1264
        %v1664 = vunpack.c.l.b16 %v1265
        %v1665 = vunpack.c.h.b16 %v1265
        %v1666 = vunpack.c.l.b16 %v1266
        %v1667 = vunpack.c.h.b16 %v1266
        %v1668 = vunpack.c.l.b16 %v1267
        %v1669 = vunpack.c.h.b16 %v1267
        %v1670 = vunpack.c.l.b16 %v1268
        %v1671 = vunpack.c.h.b16 %v1268
        %v1672 = vunpack.c.l.b16 %v1269
        %v1673 = vunpack.c.h.b16 %v1269
        %v1674 = vunpack.c.l.b16 %v1270
        %v1675 = vunpack.c.h.b16 %v1270
        %v1676 = vunpack.c.l.b16 %v1271
        %v1677 = vunpack.c.h.b16 %v1271
        %v1678 = vunpack.c.l.b16 %v1272
        %v1679 = vunpack.c.h.b16 %v1272
        %v1680 = vunpack.c.l.b16 %v1273
        %v1681 = vunpack.c.h.b16 %v1273
        %v1682 = vunpack.c.l.b16 %v1274
        %v1683 = vunpack.c.h.b16 %v1274
        %v1684 = vunpack.c.l.b16 %v1275
        %v1685 = vunpack.c.h.b16 %v1275
        %v1686 = vunpack.c.l.b16 %v1276
        %v1687 = vunpack.c.h.b16 %v1276
        %v1688 = vunpack.c.l.b16 %v1277
        %v1689 = vunpack.c.h.b16 %v1277
        %v1690 = vunpack.c.l.b16 %v1278
        %v1691 = vunpack.c.h.b16 %v1278
        %v1692 = vunpack.c.l.b16 %v1279
        %v1693 = vunpack.c.h.b16 %v1279
        %v1694 = vunpack.c.l.b16 %v1280
        %v1695 = vunpack.c.h.b16 %v1280
        %v1696 = vunpack.c.l.b16 %v1281
        %v1697 = vunpack.c.h.b16 %v1281
        %v1698 = vpack.c.b16 %v1574, %v1570
        %v1699 = vpack.c.b16 %v1575, %v1571
        %v1700 = vpack.c.b16 %v1576, %v1572
        %v1701 = vpack.c.b16 %v1577, %v1573
        %v1702 = vpack.c.b16 %v1582, %v1578
        %v1703 = vpack.c.b16 %v1583, %v1579
        %v1704 = vpack.c.b16 %v1584, %v1580
        %v1705 = vpack.c.b16 %v1585, %v1581
        %v1706 = vpack.c.b16 %v1590, %v1586
        %v1707 = vpack.c.b16 %v1591, %v1587
        %v1708 = vpack.c.b16 %v1592, %v1588
        %v1709 = vpack.c.b16 %v1593, %v1589
        %v1710 = vpack.c.b16 %v1598, %v1594
        %v1711 = vpack.c.b16 %v1599, %v1595
        %v1712 = vpack.c.b16 %v1600, %v1596
        %v1713 = vpack.c.b16 %v1601, %v1597
        %v1714 = vpack.c.b16 %v1606, %v1602
        %v1715 = vpack.c.b16 %v1607, %v1603
        %v1716 = vpack.c.b16 %v1608, %v1604
        %v1717 = vpack.c.b16 %v1609, %v1605
        %v1718 = vpack.c.b16 %v1614, %v1610
        %v1719 = vpack.c.b16 %v1615, %v1611
        %v1720 = vpack.c.b16 %v1616, %v1612
        %v1721 = vpack.c.b16 %v1617, %v1613
        %v1722 = vpack.c.b16 %v1622, %v1618
        %v1723 = vpack.c.b16 %v1623, %v1619
        %v1724 = vpack.c.b16 %v1624, %v1620
        %v1725 = vpack.c.b16 %v1625, %v1621
        %v1726 = vpack.c.b16 %v1630, %v1626
        %v1727 = vpack.c.b16 %v1631, %v1627
        %v1728 = vpack.c.b16 %v1632, %v1628
        %v1729 = vpack.c.b16 %v1633, %v1629
        %v1730 = vpack.c.b16 %v1638, %v1634
        %v1731 = vpack.c.b16 %v1639, %v1635
        %v1732 = vpack.c.b16 %v1640, %v1636
        %v1733 = vpack.c.b16 %v1641, %v1637
        %v1734 = vpack.c.b16 %v1646, %v1642
        %v1735 = vpack.c.b16 %v1647, %v1643
        %v1736 = vpack.c.b16 %v1648, %v1644
        %v1737 = vpack.c.b16 %v1649, %v1645
        %v1738 = vpack.c.b16 %v1654, %v1650
        %v1739 = vpack.c.b16 %v1655, %v1651
        %v1740 = vpack.c.b16 %v1656, %v1652
        %v1741 = vpack.c.b16 %v1657, %v1653
        %v1742 = vpack.c.b16 %v1662, %v1658
        %v1743 = vpack.c.b16 %v1663, %v1659
        %v1744 = vpack.c.b16 %v1664, %v1660
        %v1745 = vpack.c.b16 %v1665, %v1661
        %v1746 = vpack.c.b16 %v1670, %v1666
        %v1747 = vpack.c.b16 %v1671, %v1667
        %v1748 = vpack.c.b16 %v1672, %v1668
        %v1749 = vpack.c.b16 %v1673, %v1669
        %v1750 = vpack.c.b16 %v1678, %v1674
        %v1751 = vpack.c.b16 %v1679, %v1675
        %v1752 = vpack.c.b16 %v1680, %v1676
        %v1753 = vpack.c.b16 %v1681, %v1677
        %v1754 = vpack.c.b16 %v1686, %v1682
        %v1755 = vpack.c.b16 %v1687, %v1683
        %v1756 = vpack.c.b16 %v1688, %v1684
        %v1757 = vpack.c.b16 %v1689, %v1685
        %v1758 = vpack.c.b16 %v1694, %v1690
        %v1759 = vpack.c.b16 %v1695, %v1691
        %v1760 = vpack.c.b16 %v1696, %v1692
        %v1761 = vpack.c.b16 %v1697, %v1693
        %1826 = vmatpush.bf16.msra.mxu0 %v1289
        %1827 = vmatpush.bf16.msra.mxu0 %v1288
        %1828 = vmatpush.bf16.msra.mxu0 %v1287
        %1829 = vmatpush.bf16.msra.mxu0 %v1286
        %1830 = vmatpush.bf16.msra.mxu0 %v1285
        %1831 = vmatpush.bf16.msra.mxu0 %v1284
        %1832 = vmatpush.bf16.msra.mxu0 %v1283
        %1833 = vmatpush.bf16.msra.mxu0 %v1282
        %1834 = vmatmul.bf16.gmra.mxu0 %v1698
        %v1835 = vpop.f32.mrf.mxu0
        %v1836 = vadd.f32 %v1349, %v1835
        %v1837 = vpop.f32.mrf.mxu0
        %v1838 = vadd.f32 %v1354, %v1837
        %1839 = vmatmul.bf16.gmra.mxu0 %v1702
        %v1840 = vpop.f32.mrf.mxu0
        %v1841 = vadd.f32 %v1359, %v1840
        %v1842 = vpop.f32.mrf.mxu0
        %v1843 = vadd.f32 %v1364, %v1842
        %1844 = vmatmul.bf16.gmra.mxu0 %v1706
        %v1845 = vpop.f32.mrf.mxu0
        %v1846 = vadd.f32 %v1369, %v1845
        %v1847 = vpop.f32.mrf.mxu0
        %v1848 = vadd.f32 %v1374, %v1847
        %1849 = vmatmul.bf16.gmra.mxu0 %v1710
        %v1850 = vpop.f32.mrf.mxu0
        %v1851 = vadd.f32 %v1379, %v1850
        %v1852 = vpop.f32.mrf.mxu0
        %v1853 = vadd.f32 %v1384, %v1852
        %1854 = vmatmul.bf16.gmra.mxu0 %v1714
        %v1855 = vpop.f32.mrf.mxu0
        %v1856 = vadd.f32 %v1389, %v1855
        %v1857 = vpop.f32.mrf.mxu0
        %v1858 = vadd.f32 %v1394, %v1857
        %1859 = vmatmul.bf16.gmra.mxu0 %v1718
        %v1860 = vpop.f32.mrf.mxu0
        %v1861 = vadd.f32 %v1399, %v1860
        %v1862 = vpop.f32.mrf.mxu0
        %v1863 = vadd.f32 %v1404, %v1862
        %1864 = vmatmul.bf16.gmra.mxu0 %v1722
        %v1865 = vpop.f32.mrf.mxu0
        %v1866 = vadd.f32 %v1409, %v1865
        %v1867 = vpop.f32.mrf.mxu0
        %v1868 = vadd.f32 %v1414, %v1867
        %1869 = vmatmul.bf16.gmra.mxu0 %v1726
        %v1870 = vpop.f32.mrf.mxu0
        %v1871 = vadd.f32 %v1419, %v1870
        %v1872 = vpop.f32.mrf.mxu0
        %v1873 = vadd.f32 %v1424, %v1872
        %1874 = vmatmul.bf16.gmra.mxu0 %v1730
        %v1875 = vpop.f32.mrf.mxu0
        %v1876 = vadd.f32 %v1429, %v1875
        %v1877 = vpop.f32.mrf.mxu0
        %v1878 = vadd.f32 %v1434, %v1877
        %1879 = vmatmul.bf16.gmra.mxu0 %v1734
        %v1880 = vpop.f32.mrf.mxu0
        %v1881 = vadd.f32 %v1439, %v1880
        %v1882 = vpop.f32.mrf.mxu0
        %v1883 = vadd.f32 %v1444, %v1882
        %1884 = vmatmul.bf16.gmra.mxu0 %v1738
        %v1885 = vpop.f32.mrf.mxu0
        %v1886 = vadd.f32 %v1449, %v1885
        %v1887 = vpop.f32.mrf.mxu0
        %v1888 = vadd.f32 %v1454, %v1887
        %1889 = vmatmul.bf16.gmra.mxu0 %v1742
        %v1890 = vpop.f32.mrf.mxu0
        %v1891 = vadd.f32 %v1459, %v1890
        %v1892 = vpop.f32.mrf.mxu0
        %v1893 = vadd.f32 %v1464, %v1892
        %1894 = vmatmul.bf16.gmra.mxu0 %v1746
        %v1895 = vpop.f32.mrf.mxu0
        %v1896 = vadd.f32 %v1469, %v1895
        %v1897 = vpop.f32.mrf.mxu0
        %v1898 = vadd.f32 %v1474, %v1897
        %1899 = vmatmul.bf16.gmra.mxu0 %v1750
        %v1900 = vpop.f32.mrf.mxu0
        %v1901 = vadd.f32 %v1479, %v1900
        %v1902 = vpop.f32.mrf.mxu0
        %v1903 = vadd.f32 %v1484, %v1902
        %1904 = vmatmul.bf16.gmra.mxu0 %v1754
        %v1905 = vpop.f32.mrf.mxu0
        %v1906 = vadd.f32 %v1489, %v1905
        %v1907 = vpop.f32.mrf.mxu0
        %v1908 = vadd.f32 %v1494, %v1907
        %1909 = vmatmul.bf16.gmra.mxu0 %v1758
        %v1910 = vpop.f32.mrf.mxu0
        %v1911 = vadd.f32 %v1499, %v1910
        %v1912 = vpop.f32.mrf.mxu0
        %v1913 = vadd.f32 %v1504, %v1912
        %1914 = vdwg.mxu0
        %1915 = vmatpush.bf16.msra.mxu0 %v1297
        %1916 = vmatpush.bf16.msra.mxu0 %v1296
        %1917 = vmatpush.bf16.msra.mxu0 %v1295
        %1918 = vmatpush.bf16.msra.mxu0 %v1294
        %1919 = vmatpush.bf16.msra.mxu0 %v1293
        %1920 = vmatpush.bf16.msra.mxu0 %v1292
        %1921 = vmatpush.bf16.msra.mxu0 %v1291
        %1922 = vmatpush.bf16.msra.mxu0 %v1290
        %1923 = vmatmul.bf16.gmra.mxu0 %v1699
        %v1924 = vpop.f32.mrf.mxu0
        %v1925 = vadd.f32 %v1836, %v1924
        %v1926 = vpop.f32.mrf.mxu0
        %v1927 = vadd.f32 %v1838, %v1926
        %1928 = vmatmul.bf16.gmra.mxu0 %v1703
        %v1929 = vpop.f32.mrf.mxu0
        %v1930 = vadd.f32 %v1841, %v1929
        %v1931 = vpop.f32.mrf.mxu0
        %v1932 = vadd.f32 %v1843, %v1931
        %1933 = vmatmul.bf16.gmra.mxu0 %v1707
        %v1934 = vpop.f32.mrf.mxu0
        %v1935 = vadd.f32 %v1846, %v1934
        %v1936 = vpop.f32.mrf.mxu0
        %v1937 = vadd.f32 %v1848, %v1936
        %1938 = vmatmul.bf16.gmra.mxu0 %v1711
        %v1939 = vpop.f32.mrf.mxu0
        %v1940 = vadd.f32 %v1851, %v1939
        %v1941 = vpop.f32.mrf.mxu0
        %v1942 = vadd.f32 %v1853, %v1941
        %1943 = vmatmul.bf16.gmra.mxu0 %v1715
        %v1944 = vpop.f32.mrf.mxu0
        %v1945 = vadd.f32 %v1856, %v1944
        %v1946 = vpop.f32.mrf.mxu0
        %v1947 = vadd.f32 %v1858, %v1946
        %1948 = vmatmul.bf16.gmra.mxu0 %v1719
        %v1949 = vpop.f32.mrf.mxu0
        %v1950 = vadd.f32 %v1861, %v1949
        %v1951 = vpop.f32.mrf.mxu0
        %v1952 = vadd.f32 %v1863, %v1951
        %1953 = vmatmul.bf16.gmra.mxu0 %v1723
        %v1954 = vpop.f32.mrf.mxu0
        %v1955 = vadd.f32 %v1866, %v1954
        %v1956 = vpop.f32.mrf.mxu0
        %v1957 = vadd.f32 %v1868, %v1956
        %1958 = vmatmul.bf16.gmra.mxu0 %v1727
        %v1959 = vpop.f32.mrf.mxu0
        %v1960 = vadd.f32 %v1871, %v1959
        %v1961 = vpop.f32.mrf.mxu0
        %v1962 = vadd.f32 %v1873, %v1961
        %1963 = vmatmul.bf16.gmra.mxu0 %v1731
        %v1964 = vpop.f32.mrf.mxu0
        %v1965 = vadd.f32 %v1876, %v1964
        %v1966 = vpop.f32.mrf.mxu0
        %v1967 = vadd.f32 %v1878, %v1966
        %1968 = vmatmul.bf16.gmra.mxu0 %v1735
        %v1969 = vpop.f32.mrf.mxu0
        %v1970 = vadd.f32 %v1881, %v1969
        %v1971 = vpop.f32.mrf.mxu0
        %v1972 = vadd.f32 %v1883, %v1971
        %1973 = vmatmul.bf16.gmra.mxu0 %v1739
        %v1974 = vpop.f32.mrf.mxu0
        %v1975 = vadd.f32 %v1886, %v1974
        %v1976 = vpop.f32.mrf.mxu0
        %v1977 = vadd.f32 %v1888, %v1976
        %1978 = vmatmul.bf16.gmra.mxu0 %v1743
        %v1979 = vpop.f32.mrf.mxu0
        %v1980 = vadd.f32 %v1891, %v1979
        %v1981 = vpop.f32.mrf.mxu0
        %v1982 = vadd.f32 %v1893, %v1981
        %1983 = vmatmul.bf16.gmra.mxu0 %v1747
        %v1984 = vpop.f32.mrf.mxu0
        %v1985 = vadd.f32 %v1896, %v1984
        %v1986 = vpop.f32.mrf.mxu0
        %v1987 = vadd.f32 %v1898, %v1986
        %1988 = vmatmul.bf16.gmra.mxu0 %v1751
        %v1989 = vpop.f32.mrf.mxu0
        %v1990 = vadd.f32 %v1901, %v1989
        %v1991 = vpop.f32.mrf.mxu0
        %v1992 = vadd.f32 %v1903, %v1991
        %1993 = vmatmul.bf16.gmra.mxu0 %v1755
        %v1994 = vpop.f32.mrf.mxu0
        %v1995 = vadd.f32 %v1906, %v1994
        %v1996 = vpop.f32.mrf.mxu0
        %v1997 = vadd.f32 %v1908, %v1996
        %1998 = vmatmul.bf16.gmra.mxu0 %v1759
        %v1999 = vpop.f32.mrf.mxu0
        %v2000 = vadd.f32 %v1911, %v1999
        %v2001 = vpop.f32.mrf.mxu0
        %v2002 = vadd.f32 %v1913, %v2001
        %2003 = vdwg.mxu0
        %2004 = vmatpush.bf16.msra.mxu0 %v1305
        %2005 = vmatpush.bf16.msra.mxu0 %v1304
        %2006 = vmatpush.bf16.msra.mxu0 %v1303
        %2007 = vmatpush.bf16.msra.mxu0 %v1302
        %2008 = vmatpush.bf16.msra.mxu0 %v1301
        %2009 = vmatpush.bf16.msra.mxu0 %v1300
        %2010 = vmatpush.bf16.msra.mxu0 %v1299
        %2011 = vmatpush.bf16.msra.mxu0 %v1298
        %2012 = vmatmul.bf16.gmra.mxu0 %v1700
        %v2013 = vpop.f32.mrf.mxu0
        %v2014 = vadd.f32 %v1925, %v2013
        %v2015 = vpop.f32.mrf.mxu0
        %v2016 = vadd.f32 %v1927, %v2015
        %2017 = vmatmul.bf16.gmra.mxu0 %v1704
        %v2018 = vpop.f32.mrf.mxu0
        %v2019 = vadd.f32 %v1930, %v2018
        %v2020 = vpop.f32.mrf.mxu0
        %v2021 = vadd.f32 %v1932, %v2020
        %2022 = vmatmul.bf16.gmra.mxu0 %v1708
        %v2023 = vpop.f32.mrf.mxu0
        %v2024 = vadd.f32 %v1935, %v2023
        %v2025 = vpop.f32.mrf.mxu0
        %v2026 = vadd.f32 %v1937, %v2025
        %2027 = vmatmul.bf16.gmra.mxu0 %v1712
        %v2028 = vpop.f32.mrf.mxu0
        %v2029 = vadd.f32 %v1940, %v2028
        %v2030 = vpop.f32.mrf.mxu0
        %v2031 = vadd.f32 %v1942, %v2030
        %2032 = vmatmul.bf16.gmra.mxu0 %v1716
        %v2033 = vpop.f32.mrf.mxu0
        %v2034 = vadd.f32 %v1945, %v2033
        %v2035 = vpop.f32.mrf.mxu0
        %v2036 = vadd.f32 %v1947, %v2035
        %2037 = vmatmul.bf16.gmra.mxu0 %v1720
        %v2038 = vpop.f32.mrf.mxu0
        %v2039 = vadd.f32 %v1950, %v2038
        %v2040 = vpop.f32.mrf.mxu0
        %v2041 = vadd.f32 %v1952, %v2040
        %2042 = vmatmul.bf16.gmra.mxu0 %v1724
        %v2043 = vpop.f32.mrf.mxu0
        %v2044 = vadd.f32 %v1955, %v2043
        %v2045 = vpop.f32.mrf.mxu0
        %v2046 = vadd.f32 %v1957, %v2045
        %2047 = vmatmul.bf16.gmra.mxu0 %v1728
        %v2048 = vpop.f32.mrf.mxu0
        %v2049 = vadd.f32 %v1960, %v2048
        %v2050 = vpop.f32.mrf.mxu0
        %v2051 = vadd.f32 %v1962, %v2050
        %2052 = vmatmul.bf16.gmra.mxu0 %v1732
        %v2053 = vpop.f32.mrf.mxu0
        %v2054 = vadd.f32 %v1965, %v2053
        %v2055 = vpop.f32.mrf.mxu0
        %v2056 = vadd.f32 %v1967, %v2055
        %2057 = vmatmul.bf16.gmra.mxu0 %v1736
        %v2058 = vpop.f32.mrf.mxu0
        %v2059 = vadd.f32 %v1970, %v2058
        %v2060 = vpop.f32.mrf.mxu0
        %v2061 = vadd.f32 %v1972, %v2060
        %2062 = vmatmul.bf16.gmra.mxu0 %v1740
        %v2063 = vpop.f32.mrf.mxu0
        %v2064 = vadd.f32 %v1975, %v2063
        %v2065 = vpop.f32.mrf.mxu0
        %v2066 = vadd.f32 %v1977, %v2065
        %2067 = vmatmul.bf16.gmra.mxu0 %v1744
        %v2068 = vpop.f32.mrf.mxu0
        %v2069 = vadd.f32 %v1980, %v2068
        %v2070 = vpop.f32.mrf.mxu0
        %v2071 = vadd.f32 %v1982, %v2070
        %2072 = vmatmul.bf16.gmra.mxu0 %v1748
        %v2073 = vpop.f32.mrf.mxu0
        %v2074 = vadd.f32 %v1985, %v2073
        %v2075 = vpop.f32.mrf.mxu0
        %v2076 = vadd.f32 %v1987, %v2075
        %2077 = vmatmul.bf16.gmra.mxu0 %v1752
        %v2078 = vpop.f32.mrf.mxu0
        %v2079 = vadd.f32 %v1990, %v2078
        %v2080 = vpop.f32.mrf.mxu0
        %v2081 = vadd.f32 %v1992, %v2080
        %2082 = vmatmul.bf16.gmra.mxu0 %v1756
        %v2083 = vpop.f32.mrf.mxu0
        %v2084 = vadd.f32 %v1995, %v2083
        %v2085 = vpop.f32.mrf.mxu0
        %v2086 = vadd.f32 %v1997, %v2085
        %2087 = vmatmul.bf16.gmra.mxu0 %v1760
        %v2088 = vpop.f32.mrf.mxu0
        %v2089 = vadd.f32 %v2000, %v2088
        %v2090 = vpop.f32.mrf.mxu0
        %v2091 = vadd.f32 %v2002, %v2090
        %2092 = vdwg.mxu0
        %2093 = vmatpush.bf16.msra.mxu0 %v1313
        %2094 = vmatpush.bf16.msra.mxu0 %v1312
        %2095 = vmatpush.bf16.msra.mxu0 %v1311
        %2096 = vmatpush.bf16.msra.mxu0 %v1310
        %2097 = vmatpush.bf16.msra.mxu0 %v1309
        %2098 = vmatpush.bf16.msra.mxu0 %v1308
        %2099 = vmatpush.bf16.msra.mxu0 %v1307
        %2100 = vmatpush.bf16.msra.mxu0 %v1306
        %2101 = vmatmul.bf16.gmra.mxu0 %v1701
        %v2102 = vpop.f32.mrf.mxu0
        %v2103 = vadd.f32 %v2014, %v2102
        %v2104 = vpop.f32.mrf.mxu0
        %v2105 = vadd.f32 %v2016, %v2104
        %2106 = vmatmul.bf16.gmra.mxu0 %v1705
        %v2107 = vpop.f32.mrf.mxu0
        %v2108 = vadd.f32 %v2019, %v2107
        %v2109 = vpop.f32.mrf.mxu0
        %v2110 = vadd.f32 %v2021, %v2109
        %2111 = vmatmul.bf16.gmra.mxu0 %v1709
        %v2112 = vpop.f32.mrf.mxu0
        %v2113 = vadd.f32 %v2024, %v2112
        %v2114 = vpop.f32.mrf.mxu0
        %v2115 = vadd.f32 %v2026, %v2114
        %2116 = vmatmul.bf16.gmra.mxu0 %v1713
        %v2117 = vpop.f32.mrf.mxu0
        %v2118 = vadd.f32 %v2029, %v2117
        %v2119 = vpop.f32.mrf.mxu0
        %v2120 = vadd.f32 %v2031, %v2119
        %2121 = vmatmul.bf16.gmra.mxu0 %v1717
        %v2122 = vpop.f32.mrf.mxu0
        %v2123 = vadd.f32 %v2034, %v2122
        %v2124 = vpop.f32.mrf.mxu0
        %v2125 = vadd.f32 %v2036, %v2124
        %2126 = vmatmul.bf16.gmra.mxu0 %v1721
        %v2127 = vpop.f32.mrf.mxu0
        %v2128 = vadd.f32 %v2039, %v2127
        %v2129 = vpop.f32.mrf.mxu0
        %v2130 = vadd.f32 %v2041, %v2129
        %2131 = vmatmul.bf16.gmra.mxu0 %v1725
        %v2132 = vpop.f32.mrf.mxu0
        %v2133 = vadd.f32 %v2044, %v2132
        %v2134 = vpop.f32.mrf.mxu0
        %v2135 = vadd.f32 %v2046, %v2134
        %2136 = vmatmul.bf16.gmra.mxu0 %v1729
        %v2137 = vpop.f32.mrf.mxu0
        %v2138 = vadd.f32 %v2049, %v2137
        %v2139 = vpop.f32.mrf.mxu0
        %v2140 = vadd.f32 %v2051, %v2139
        %2141 = vmatmul.bf16.gmra.mxu0 %v1733
        %v2142 = vpop.f32.mrf.mxu0
        %v2143 = vadd.f32 %v2054, %v2142
        %v2144 = vpop.f32.mrf.mxu0
        %v2145 = vadd.f32 %v2056, %v2144
        %2146 = vmatmul.bf16.gmra.mxu0 %v1737
        %v2147 = vpop.f32.mrf.mxu0
        %v2148 = vadd.f32 %v2059, %v2147
        %v2149 = vpop.f32.mrf.mxu0
        %v2150 = vadd.f32 %v2061, %v2149
        %2151 = vmatmul.bf16.gmra.mxu0 %v1741
        %v2152 = vpop.f32.mrf.mxu0
        %v2153 = vadd.f32 %v2064, %v2152
        %v2154 = vpop.f32.mrf.mxu0
        %v2155 = vadd.f32 %v2066, %v2154
        %2156 = vmatmul.bf16.gmra.mxu0 %v1745
        %v2157 = vpop.f32.mrf.mxu0
        %v2158 = vadd.f32 %v2069, %v2157
        %v2159 = vpop.f32.mrf.mxu0
        %v2160 = vadd.f32 %v2071, %v2159
        %2161 = vmatmul.bf16.gmra.mxu0 %v1749
        %v2162 = vpop.f32.mrf.mxu0
        %v2163 = vadd.f32 %v2074, %v2162
        %v2164 = vpop.f32.mrf.mxu0
        %v2165 = vadd.f32 %v2076, %v2164
        %2166 = vmatmul.bf16.gmra.mxu0 %v1753
        %v2167 = vpop.f32.mrf.mxu0
        %v2168 = vadd.f32 %v2079, %v2167
        %v2169 = vpop.f32.mrf.mxu0
        %v2170 = vadd.f32 %v2081, %v2169
        %2171 = vmatmul.bf16.gmra.mxu0 %v1757
        %v2172 = vpop.f32.mrf.mxu0
        %v2173 = vadd.f32 %v2084, %v2172
        %v2174 = vpop.f32.mrf.mxu0
        %v2175 = vadd.f32 %v2086, %v2174
        %2176 = vmatmul.bf16.gmra.mxu0 %v1761
        %v2177 = vpop.f32.mrf.mxu0
        %v2178 = vadd.f32 %v2089, %v2177
        %v2179 = vpop.f32.mrf.mxu0
        %v2180 = vadd.f32 %v2091, %v2179
        %2181 = vdwg.mxu0
        %v2182 = vmul.f32 %v2103, 0.01
        %v2183 = vmul.f32 %v2105, 0.01
        %v2184 = vmul.f32 %v2108, 0.01
        %v2185 = vmul.f32 %v2110, 0.01
        %v2186 = vmul.f32 %v2113, 0.01
        %v2187 = vmul.f32 %v2115, 0.01
        %v2188 = vmul.f32 %v2118, 0.01
        %v2189 = vmul.f32 %v2120, 0.01
        %v2190 = vmul.f32 %v2123, 0.01
        %v2191 = vmul.f32 %v2125, 0.01
        %v2192 = vmul.f32 %v2128, 0.01
        %v2193 = vmul.f32 %v2130, 0.01
        %v2194 = vmul.f32 %v2133, 0.01
        %v2195 = vmul.f32 %v2135, 0.01
        %v2196 = vmul.f32 %v2138, 0.01
        %v2197 = vmul.f32 %v2140, 0.01
        %v2198 = vmul.f32 %v2143, 0.01
        %v2199 = vmul.f32 %v2145, 0.01
        %v2200 = vmul.f32 %v2148, 0.01
        %v2201 = vmul.f32 %v2150, 0.01
        %v2202 = vmul.f32 %v2153, 0.01
        %v2203 = vmul.f32 %v2155, 0.01
        %v2204 = vmul.f32 %v2158, 0.01
        %v2205 = vmul.f32 %v2160, 0.01
        %v2206 = vmul.f32 %v2163, 0.01
        %v2207 = vmul.f32 %v2165, 0.01
        %v2208 = vmul.f32 %v2168, 0.01
        %v2209 = vmul.f32 %v2170, 0.01
        %v2210 = vmul.f32 %v2173, 0.01
        %v2211 = vmul.f32 %v2175, 0.01
        %v2212 = vmul.f32 %v2178, 0.01
        %v2213 = vmul.f32 %v2180, 0.01
        %v2214 = vmax.f32 %v2103, %v2182
        %v2215 = vmax.f32 %v2105, %v2183
        %v2216 = vmax.f32 %v2108, %v2184
        %v2217 = vmax.f32 %v2110, %v2185
        %v2218 = vmax.f32 %v2113, %v2186
        %v2219 = vmax.f32 %v2115, %v2187
        %v2220 = vmax.f32 %v2118, %v2188
        %v2221 = vmax.f32 %v2120, %v2189
        %v2222 = vmax.f32 %v2123, %v2190
        %v2223 = vmax.f32 %v2125, %v2191
        %v2224 = vmax.f32 %v2128, %v2192
        %v2225 = vmax.f32 %v2130, %v2193
        %v2226 = vmax.f32 %v2133, %v2194
        %v2227 = vmax.f32 %v2135, %v2195
        %v2228 = vmax.f32 %v2138, %v2196
        %v2229 = vmax.f32 %v2140, %v2197
        %v2230 = vmax.f32 %v2143, %v2198
        %v2231 = vmax.f32 %v2145, %v2199
        %v2232 = vmax.f32 %v2148, %v2200
        %v2233 = vmax.f32 %v2150, %v2201
        %v2234 = vmax.f32 %v2153, %v2202
        %v2235 = vmax.f32 %v2155, %v2203
        %v2236 = vmax.f32 %v2158, %v2204
        %v2237 = vmax.f32 %v2160, %v2205
        %v2238 = vmax.f32 %v2163, %v2206
        %v2239 = vmax.f32 %v2165, %v2207
        %v2240 = vmax.f32 %v2168, %v2208
        %v2241 = vmax.f32 %v2170, %v2209
        %v2242 = vmax.f32 %v2173, %v2210
        %v2243 = vmax.f32 %v2175, %v2211
        %v2244 = vmax.f32 %v2178, %v2212
        %v2245 = vmax.f32 %v2180, %v2213
        %v2246 = vld [vmem:[%s4] sm:$0xff]
        %v2247 = vld [vmem:[%s4 + $0x8] sm:$0xff]
        %v2248 = vld [vmem:[%s4 + $0x10] sm:$0xff]
        %v2249 = vld [vmem:[%s4 + $0x18] sm:$0xff]
        %v2250 = vld [vmem:[%s4 + $0x20] sm:$0xff]
        %v2251 = vld [vmem:[%s4 + $0x28] sm:$0xff]
        %v2252 = vld [vmem:[%s4 + $0x30] sm:$0xff]
        %v2253 = vld [vmem:[%s4 + $0x38] sm:$0xff]
        %v2254 = vld [vmem:[%s4 + $0x40] sm:$0xff]
        %v2255 = vld [vmem:[%s4 + $0x48] sm:$0xff]
        %v2256 = vld [vmem:[%s4 + $0x50] sm:$0xff]
        %v2257 = vld [vmem:[%s4 + $0x58] sm:$0xff]
        %v2258 = vld [vmem:[%s4 + $0x60] sm:$0xff]
        %v2259 = vld [vmem:[%s4 + $0x68] sm:$0xff]
        %v2260 = vld [vmem:[%s4 + $0x70] sm:$0xff]
        %v2261 = vld [vmem:[%s4 + $0x78] sm:$0xff]
        %v2262 = vld [vmem:[%s4 + $0x80] sm:$0xff]
        %v2263 = vld [vmem:[%s4 + $0x88] sm:$0xff]
        %v2264 = vld [vmem:[%s4 + $0x90] sm:$0xff]
        %v2265 = vld [vmem:[%s4 + $0x98] sm:$0xff]
        %v2266 = vld [vmem:[%s4 + $0xa0] sm:$0xff]
        %v2267 = vld [vmem:[%s4 + $0xa8] sm:$0xff]
        %v2268 = vld [vmem:[%s4 + $0xb0] sm:$0xff]
        %v2269 = vld [vmem:[%s4 + $0xb8] sm:$0xff]
        %v2270 = vld [vmem:[%s4 + $0xc0] sm:$0xff]
        %v2271 = vld [vmem:[%s4 + $0xc8] sm:$0xff]
        %v2272 = vld [vmem:[%s4 + $0xd0] sm:$0xff]
        %v2273 = vld [vmem:[%s4 + $0xd8] sm:$0xff]
        %v2274 = vld [vmem:[%s4 + $0xe0] sm:$0xff]
        %v2275 = vld [vmem:[%s4 + $0xe8] sm:$0xff]
        %v2276 = vld [vmem:[%s4 + $0xf0] sm:$0xff]
        %v2277 = vld [vmem:[%s4 + $0xf8] sm:$0xff]
        %2279 = vset.pattern.permute.xlu0 0
        %2280 = vperm.xlu0 %2279, %v2246
        %v2281 = vpop.permute.xlu0 %2280
        %2284 = vset.pattern.permute.xlu0 0
        %2285 = vperm.xlu0 %2284, %v2247
        %v2286 = vpop.permute.xlu0 %2285
        %2289 = vset.pattern.permute.xlu0 0
        %2290 = vperm.xlu0 %2289, %v2248
        %v2291 = vpop.permute.xlu0 %2290
        %2294 = vset.pattern.permute.xlu0 0
        %2295 = vperm.xlu0 %2294, %v2249
        %v2296 = vpop.permute.xlu0 %2295
        %2299 = vset.pattern.permute.xlu0 0
        %2300 = vperm.xlu0 %2299, %v2250
        %v2301 = vpop.permute.xlu0 %2300
        %2304 = vset.pattern.permute.xlu0 0
        %2305 = vperm.xlu0 %2304, %v2251
        %v2306 = vpop.permute.xlu0 %2305
        %2309 = vset.pattern.permute.xlu0 0
        %2310 = vperm.xlu0 %2309, %v2252
        %v2311 = vpop.permute.xlu0 %2310
        %2314 = vset.pattern.permute.xlu0 0
        %2315 = vperm.xlu0 %2314, %v2253
        %v2316 = vpop.permute.xlu0 %2315
        %2319 = vset.pattern.permute.xlu0 0
        %2320 = vperm.xlu0 %2319, %v2254
        %v2321 = vpop.permute.xlu0 %2320
        %2324 = vset.pattern.permute.xlu0 0
        %2325 = vperm.xlu0 %2324, %v2255
        %v2326 = vpop.permute.xlu0 %2325
        %2329 = vset.pattern.permute.xlu0 0
        %2330 = vperm.xlu0 %2329, %v2256
        %v2331 = vpop.permute.xlu0 %2330
        %2334 = vset.pattern.permute.xlu0 0
        %2335 = vperm.xlu0 %2334, %v2257
        %v2336 = vpop.permute.xlu0 %2335
        %2339 = vset.pattern.permute.xlu0 0
        %2340 = vperm.xlu0 %2339, %v2258
        %v2341 = vpop.permute.xlu0 %2340
        %2344 = vset.pattern.permute.xlu0 0
        %2345 = vperm.xlu0 %2344, %v2259
        %v2346 = vpop.permute.xlu0 %2345
        %2349 = vset.pattern.permute.xlu0 0
        %2350 = vperm.xlu0 %2349, %v2260
        %v2351 = vpop.permute.xlu0 %2350
        %2354 = vset.pattern.permute.xlu0 0
        %2355 = vperm.xlu0 %2354, %v2261
        %v2356 = vpop.permute.xlu0 %2355
        %2359 = vset.pattern.permute.xlu0 0
        %2360 = vperm.xlu0 %2359, %v2262
        %v2361 = vpop.permute.xlu0 %2360
        %2364 = vset.pattern.permute.xlu0 0
        %2365 = vperm.xlu0 %2364, %v2263
        %v2366 = vpop.permute.xlu0 %2365
        %2369 = vset.pattern.permute.xlu0 0
        %2370 = vperm.xlu0 %2369, %v2264
        %v2371 = vpop.permute.xlu0 %2370
        %2374 = vset.pattern.permute.xlu0 0
        %2375 = vperm.xlu0 %2374, %v2265
        %v2376 = vpop.permute.xlu0 %2375
        %2379 = vset.pattern.permute.xlu0 0
        %2380 = vperm.xlu0 %2379, %v2266
        %v2381 = vpop.permute.xlu0 %2380
        %2384 = vset.pattern.permute.xlu0 0
        %2385 = vperm.xlu0 %2384, %v2267
        %v2386 = vpop.permute.xlu0 %2385
        %2389 = vset.pattern.permute.xlu0 0
        %2390 = vperm.xlu0 %2389, %v2268
        %v2391 = vpop.permute.xlu0 %2390
        %2394 = vset.pattern.permute.xlu0 0
        %2395 = vperm.xlu0 %2394, %v2269
        %v2396 = vpop.permute.xlu0 %2395
        %2399 = vset.pattern.permute.xlu0 0
        %2400 = vperm.xlu0 %2399, %v2270
        %v2401 = vpop.permute.xlu0 %2400
        %2404 = vset.pattern.permute.xlu0 0
        %2405 = vperm.xlu0 %2404, %v2271
        %v2406 = vpop.permute.xlu0 %2405
        %2409 = vset.pattern.permute.xlu0 0
        %2410 = vperm.xlu0 %2409, %v2272
        %v2411 = vpop.permute.xlu0 %2410
        %2414 = vset.pattern.permute.xlu0 0
        %2415 = vperm.xlu0 %2414, %v2273
        %v2416 = vpop.permute.xlu0 %2415
        %2419 = vset.pattern.permute.xlu0 0
        %2420 = vperm.xlu0 %2419, %v2274
        %v2421 = vpop.permute.xlu0 %2420
        %2424 = vset.pattern.permute.xlu0 0
        %2425 = vperm.xlu0 %2424, %v2275
        %v2426 = vpop.permute.xlu0 %2425
        %2429 = vset.pattern.permute.xlu0 0
        %2430 = vperm.xlu0 %2429, %v2276
        %v2431 = vpop.permute.xlu0 %2430
        %2434 = vset.pattern.permute.xlu0 0
        %2435 = vperm.xlu0 %2434, %v2277
        %v2436 = vpop.permute.xlu0 %2435
        %v2438 = vmul.f32 %v2214, %v2281
        %v2439 = vmul.f32 %v2215, %v2286
        %v2440 = vmul.f32 %v2216, %v2291
        %v2441 = vmul.f32 %v2217, %v2296
        %v2442 = vmul.f32 %v2218, %v2301
        %v2443 = vmul.f32 %v2219, %v2306
        %v2444 = vmul.f32 %v2220, %v2311
        %v2445 = vmul.f32 %v2221, %v2316
        %v2446 = vmul.f32 %v2222, %v2321
        %v2447 = vmul.f32 %v2223, %v2326
        %v2448 = vmul.f32 %v2224, %v2331
        %v2449 = vmul.f32 %v2225, %v2336
        %v2450 = vmul.f32 %v2226, %v2341
        %v2451 = vmul.f32 %v2227, %v2346
        %v2452 = vmul.f32 %v2228, %v2351
        %v2453 = vmul.f32 %v2229, %v2356
        %v2454 = vmul.f32 %v2230, %v2361
        %v2455 = vmul.f32 %v2231, %v2366
        %v2456 = vmul.f32 %v2232, %v2371
        %v2457 = vmul.f32 %v2233, %v2376
        %v2458 = vmul.f32 %v2234, %v2381
        %v2459 = vmul.f32 %v2235, %v2386
        %v2460 = vmul.f32 %v2236, %v2391
        %v2461 = vmul.f32 %v2237, %v2396
        %v2462 = vmul.f32 %v2238, %v2401
        %v2463 = vmul.f32 %v2239, %v2406
        %v2464 = vmul.f32 %v2240, %v2411
        %v2465 = vmul.f32 %v2241, %v2416
        %v2466 = vmul.f32 %v2242, %v2421
        %v2467 = vmul.f32 %v2243, %v2426
        %v2468 = vmul.f32 %v2244, %v2431
        %v2469 = vmul.f32 %v2245, %v2436
        %v2470 = vadd.f32 %v2438, %v2439
        %v2471 = vadd.f32 %v2470, %v2440
        %v2472 = vadd.f32 %v2471, %v2441
        %v2473 = vadd.f32 %v2472, %v2442
        %v2474 = vadd.f32 %v2473, %v2443
        %v2475 = vadd.f32 %v2474, %v2444
        %v2476 = vadd.f32 %v2475, %v2445
        %v2477 = vadd.f32 %v2476, %v2446
        %v2478 = vadd.f32 %v2477, %v2447
        %v2479 = vadd.f32 %v2478, %v2448
        %v2480 = vadd.f32 %v2479, %v2449
        %v2481 = vadd.f32 %v2480, %v2450
        %v2482 = vadd.f32 %v2481, %v2451
        %v2483 = vadd.f32 %v2482, %v2452
        %v2484 = vadd.f32 %v2483, %v2453
        %v2485 = vadd.f32 %v2484, %v2454
        %v2486 = vadd.f32 %v2485, %v2455
        %v2487 = vadd.f32 %v2486, %v2456
        %v2488 = vadd.f32 %v2487, %v2457
        %v2489 = vadd.f32 %v2488, %v2458
        %v2490 = vadd.f32 %v2489, %v2459
        %v2491 = vadd.f32 %v2490, %v2460
        %v2492 = vadd.f32 %v2491, %v2461
        %v2493 = vadd.f32 %v2492, %v2462
        %v2494 = vadd.f32 %v2493, %v2463
        %v2495 = vadd.f32 %v2494, %v2464
        %v2496 = vadd.f32 %v2495, %v2465
        %v2497 = vadd.f32 %v2496, %v2466
        %v2498 = vadd.f32 %v2497, %v2467
        %v2499 = vadd.f32 %v2498, %v2468
        %v2500 = vadd.f32 %v2499, %v2469
        %v2501 = vrot.slane %v2500, 4
        %v2502 = vadd.f32 %v2500, %v2501
        %v2503 = vrot.slane %v2502, 2
        %v2504 = vadd.f32 %v2502, %v2503
        %v2505 = vrot.slane %v2504, 1
        %v2506 = vadd.f32 %v2504, %v2505
        %v2507 = vld [vmem:[#allocation2] sm:$0x1]
        %2509 = vset.pattern.permute.xlu0 0
        %2510 = vperm.xlu0 %2509, %v2507
        %v2511 = vpop.permute.xlu0 %2510
        %v2513 = vperm.slane %v2511, 0
        %v2514 = vadd.f32 %v2506, %v2513
        %v2515 = vand.u32 2147483647, %v2514
        %v2516 = vsub.f32 0.0, %v2515
        %v2517 = vmul.f32 %v2516, 1.442695
        %v2518 = vpow.pop %v2517
        %v2519 = vadd.f32 %v2518, 1.0
        %v2520 = vrcp.pop %v2519
        %v2521 = vmul.f32 %v2519, %v2520
        %v2522 = vsub.f32 1.0, %v2521
        %v2523 = vmul.f32 %v2520, %v2522
        %v2524 = vadd.f32 %v2520, %v2523
        %vm2525 = vweird.f32 %v2519
        %vm2526 = vweird.f32 %v2520
        %vm2527 = vmor %vm2525, %vm2526
        %v2528 = vsel %vm2527, %v2520, %v2524
        %v2529 = vand.u32 2147483647, %v2519
        %vm2530 = vcmp.eq.f32.partialorder %v2529, 8.507059e+37
        %v2531 = vand.u32 %v2519, 2147483648
        %v2532 = vor.u32 1.1754944e-38, %v2531
        %v2533 = vsel %vm2530, %v2532, %v2528
        %vm2534 = vcmp.ge.f32.partialorder %v2514, 0.0
        %v2535 = vmul.f32 %v2518, %v2533
        %v2536 = vsel %vm2534, %v2533, %v2535
        %2537 = vst [vmem:[%s271] sm:$0x1] %v2536
        %p2538 = scmp.lt.s32.totalorder %s20, 1
        %s2539 = scalar_select %p2538, %s20, 1
        %s2540 = scalar_lea.vmem %s6, %s2539
        // Predicated region
        $region49: #{bst_without_forward.1} parent=43 // pred_check
          %p2541 = pneg %p169
        $region50: #{bst_without_forward.1} parent=43 // pred_check_branch
          %2543 = sbr.rel (%p2541) target = $region52
        $region51: #{bst_without_forward.1} parent=43 // pred_region
          _
        $region52: #{bst_without_forward.1} parent=43 // pred_fallthru
          _
      $region44: #{bst_without_forward.1} parent=5 // pred_fallthru
        _
      %p2544 = scmp.le.s32.totalorder 2, %s15
      // Predicated region
      $region53: #{bst_without_forward.1} parent=5 // pred_check
        %p2545 = pneg %p2544
      $region54: #{bst_without_forward.1} parent=5 // pred_check_branch
        %2547 = sbr.rel (%p2545) target = $region56
      $region55: #{bst_without_forward.1} parent=5 // pred_region
        %s2548 = ssub.s32 %s15, 2
        // Predicated region
        $region57: #{bst_without_forward.1} parent=55 // pred_check
          %p2549 = pneg %p175
        $region58: #{bst_without_forward.1} parent=55 // pred_check_branch
          %2551 = sbr.rel (%p2549) target = $region60
        $region59: #{bst_without_forward.1} parent=55 // pred_region
          %p2552 = scmp.lt.s32.totalorder %s21, 1
          %s2553 = scalar_select %p2552, %s21, 1
          %s2554 = scalar_lea.vmem %s6, %s2553
        $region60: #{bst_without_forward.1} parent=55 // pred_fallthru
          _
      $region56: #{bst_without_forward.1} parent=5 // pred_fallthru
        _
    $region6: #{bst_without_forward.1} parent=1 // loop_footer
      %s19 = sadd.s32 1, %s15
    $region7: #{bst_without_forward.1} parent=1 // loop_footer_branch
      %14 = sbr.rel target = $region3
    $region8: #{bst_without_forward.1} parent=1 // loop_exit
      _
    %2555 = vsyncpa [#allocation4], 1
    %s2556 = scalar_lea.sflag [#allocation4], 1
    %2557 = vsyncpa %s2556, 1

</llo_original>
